<compile_context>
chip_gen: v7x
topology: tpu7x:2x2x1
jax: 0.10.0
libtpu: 0.0.40
codegen_flags: <defaults>
</compile_context>

<pallas_src>
import jax
import jax.numpy as jnp
import numpy as np
from jax import lax
from jax.experimental import pallas as pl
from jax.experimental.pallas import tpu as pltpu

_INV_SQRT2 = 0.7071067811865476
_BN_EPS = 1e-5


# --------------------------------------------------------------------------
# in-kernel helpers (2-D slabs: rows = batch*frames, lanes = freq*channels)
# --------------------------------------------------------------------------
def _erf(x):
    # Abramowitz & Stegun 7.1.26, |err| < 1.5e-7 (matches exact-erf nn.GELU
    # within f32 rounding).  Reciprocal on the EUP slot, one Newton refinement.
    a1, a2, a3, a4, a5 = (0.254829592, -0.284496736, 1.421413741,
                          -1.453152027, 1.061405429)
    p = 0.3275911
    s = jnp.where(x < 0.0, -1.0, 1.0)
    z = jnp.abs(x)
    d = 1.0 + p * z
    t0 = pl.reciprocal(d, approx=True)
    t = t0 * (2.0 - d * t0)                       # Newton step -> f32 exact
    poly = ((((a5 * t + a4) * t + a3) * t + a2) * t + a1) * t
    return s * (1.0 - poly * jnp.exp(-z * z))


def _gelu(x):
    return 0.5 * x * (1.0 + _erf(x * _INV_SQRT2))


def _lane_group_sum(v, group):
    """(R, W*group) -> (R, group): per-channel sum over the W lane groups.

    log-tree halving fold (O(log W) wide adds) instead of W-1 narrow adds."""
    width = v.shape[-1]
    while width > group and (width // group) % 2 == 0:
        half = width // 2
        v = v[:, :half] + v[:, half:width]
        width = half
    out = v[:, 0:group]
    for w in range(1, width // group):            # tail for non-pow2 counts
        out = out + v[:, w * group:(w + 1) * group]
    return out


def _lane_tile(v, reps):
    """(R, C) -> (R, C*reps): channel-minor tiling via O(log reps) doubling."""
    out = v
    r = 1
    while 2 * r <= reps:
        out = jnp.concatenate([out, out], axis=-1)
        r *= 2
    while r < reps:
        out = jnp.concatenate([out, v], axis=-1)
        r += 1
    return out


def _bn_scale_shift(acc, g_ref, b_ref, C, W, n_inv):
    """Training-mode BatchNorm folded into per-lane scale/shift.

    Centered two-pass variance: mean first, then sum((x-mean)^2); avoids the
    E[x^2]-E[x]^2 cancellation flagged in the review."""
    colsum = jnp.sum(acc, axis=0, keepdims=True)               # (1, W*C)
    mean_c = _lane_group_sum(colsum, C) * n_inv                # (1, C)
    d = acc - _lane_tile(mean_c, W)
    colsq = jnp.sum(d * d, axis=0, keepdims=True)              # (1, W*C)
    var_c = _lane_group_sum(colsq, C) * n_inv                  # (1, C)
    scale_c = g_ref[...] * lax.rsqrt(var_c + _BN_EPS)          # (1, C)
    shift_c = b_ref[...] - mean_c * scale_c                    # (1, C)
    both = _lane_tile(jnp.concatenate([scale_c, shift_c], axis=0), W)
    return both[0:1, :], both[1:2, :]                          # (1, W*C) each


# --------------------------------------------------------------------------
# fused kernel: conv1 -> bn1 -> GELU -> conv2 -> bn2 -> +res -> GELU -> pool
# --------------------------------------------------------------------------
def resnet_block_kernel(x_ref, m1_ref, m2_ref, g1_ref, b1_ref, g2_ref, b2_ref,
                        pool_ref, o_ref, xp_s, y1p_s):
    """Layout: rows = batch*frames (MXU M dim), lanes = freq*channels.

      x_ref   : (B, H, W*Cin)          f32 input (also the identity residual)
      m1_ref  : (3*W*Cin,  W*Cmid)     bf16 stacked banded conv1 weights
      m2_ref  : (3*W*Cmid, W*Cout)     bf16 stacked banded conv2 weights
      g*/b*   : (1, C)                 f32 BatchNorm affine params
      pool_ref: (W*Cout, (W//2)*Cout)  f32 AvgPool2d((1,2)) selection matrix
      o_ref   : (B*H, (W//2)*Cout)     f32 pooled output
      xp_s    : (B, H+2, W*Cin)        frame-padded input scratch (f32)
      y1p_s   : (B, H+2, W*Cmid)       frame-padded mid-activation scratch (f32)
    """
    B, H, Kin = x_ref.shape
    Cmid = g1_ref.shape[-1]
    Cout = g2_ref.shape[-1]
    L1 = m1_ref.shape[-1]                 # W * Cmid
    W = L1 // Cmid
    BH = B * H
    n_inv = 1.0 / float(BH * W)           # BN population size per channel

    # ---- frame-axis 'same' padding: zero ONLY the halo rows, slab-copy data.
    # (Freq-axis 'same' padding is folded into the banded weight matrices.)
    xp_s[:, 0:1, :] = jnp.zeros((B, 1, Kin), xp_s.dtype)
    xp_s[:, H + 1:H + 2, :] = jnp.zeros((B, 1, Kin), xp_s.dtype)
    xp_s[:, 1:H + 1, :] = x_ref[...]
    y1p_s[:, 0:1, :] = jnp.zeros((B, 1, L1), y1p_s.dtype)
    y1p_s[:, H + 1:H + 2, :] = jnp.zeros((B, 1, L1), y1p_s.dtype)

    # ---- conv1: batch + 3 frame taps folded into ONE bf16 MXU matmul -------
    lhs1 = jnp.concatenate(
        [xp_s[:, t:t + H, :].reshape(BH, Kin) for t in range(3)],
        axis=-1).astype(m1_ref.dtype)                       # (BH, 3*Kin) bf16
    acc1 = jnp.dot(lhs1, m1_ref[...], preferred_element_type=jnp.float32)

    scale1, shift1 = _bn_scale_shift(acc1, g1_ref, b1_ref, Cmid, W, n_inv)
    y1 = _gelu(acc1 * scale1 + shift1)                      # f32 (BH, L1)
    # Only rows 1..H are written -> the halo rows stay exactly zero and act as
    # conv2's frame padding (invariant is explicit, not incidental).
    y1p_s[:, 1:H + 1, :] = y1.reshape(B, H, L1)

    # ---- conv2: ONE bf16 MXU matmul, then bn2 + residual + GELU ------------
    lhs2 = jnp.concatenate(
        [y1p_s[:, t:t + H, :].reshape(BH, L1) for t in range(3)],
        axis=-1).astype(m2_ref.dtype)                       # (BH, 3*L1) bf16
    acc2 = jnp.dot(lhs2, m2_ref[...], preferred_element_type=jnp.float32)

    scale2, shift2 = _bn_scale_shift(acc2, g2_ref, b2_ref, Cout, W, n_inv)
    y2 = _gelu(acc2 * scale2 + shift2 + x_ref[...].reshape(BH, Kin))

    # ---- AvgPool2d((1,2)) as one small f32 matmul (no O(W) lane compaction).
    # TODO(synk): for small-W configs a lane-dense (multiple-of-128) output
    # packing would avoid masked vst; at production W=128 the last dim is 256.
    o_ref[...] = jnp.dot(y2, pool_ref[...], preferred_element_type=jnp.float32)


# --------------------------------------------------------------------------
# wrapper: layout glue + banded/stacked weights + pooling matrix + pallas_call
# --------------------------------------------------------------------------
def _band_weights(w_hwio, W):
    """Fold the freq-axis taps and the freq 'same' zero padding of a 3x3 conv
    into one banded matrix per frame tap: (KH, W*Cin, W*Cout)."""
    KH, KW, cin, cout = w_hwio.shape
    tap = np.zeros((KW, W, W), np.float32)          # tap[dx, w_src, w_out]
    for dx in range(KW):
        for wo in range(W):
            ws = wo + dx - (KW // 2)
            if 0 <= ws < W:                          # out-of-range == zero pad
                tap[dx, ws, wo] = 1.0
    m = jnp.einsum('xsw,yxio->ysiwo', jnp.asarray(tap), w_hwio)
    return m.reshape(KH, W * cin, W * cout)
    # TODO(synk): on v5e, band over ~128-lane freq tiles (with a 2-lane halo)
    # instead of the full W to cap the ~W/3 FLOP inflation of the dense band.


def _pool_matrix(W, C):
    """AvgPool2d((1,2)) in the lane-dense layout as a (W*C, (W//2)*C) matrix."""
    p = np.zeros((W * C, (W // 2) * C), np.float32)
    for w in range(W):
        for c in range(C):
            p[w * C + c, (w // 2) * C + c] = 0.5
    return jnp.asarray(p)


def resnet_forward(x_nchw, params):
    """Forward of ResNet(cnn = BasicBlock(4,8,4) + AvgPool2d((1,2)))."""
    w1, g1, b1, w2, g2, b2 = params                  # w*: HWIO ; g*/b*: (C,)
    x = jnp.transpose(x_nchw, (0, 2, 3, 1)).astype(jnp.float32)  # NCHW->NHWC
    B, H, W, Cin = x.shape
    Cmid, Cout = w1.shape[-1], w2.shape[-1]
    assert Cin == Cout, "identity shortcut requires Cin == Cout"
    assert W % 2 == 0, "AvgPool2d((1,2)) requires even n_freq"
    assert H % 8 == 0, "frame count multiple of 8 for cheap (B,H,.)<->(B*H,.) reshapes"

    BH = B * H
    x_lane = x.reshape(B, H, W * Cin)                # lane-dense: freq*channel
    # Stacked banded weights: taps concatenated along K, cast to bf16 for the
    # MXU (f32 accumulate in-kernel; BN/GELU/residual remain f32).
    m1 = _band_weights(w1, W).reshape(3 * W * Cin, W * Cmid).astype(jnp.bfloat16)
    m2 = _band_weights(w2, W).reshape(3 * W * Cmid, W * Cout).astype(jnp.bfloat16)
    pool = _pool_matrix(W, Cout)

    flops = (2 * BH * (3 * W * Cin) * (W * Cmid)
             + 2 * BH * (3 * W * Cmid) * (W * Cout)
             + 2 * BH * (W * Cout) * ((W // 2) * Cout))
    transcendentals = 2 * BH * W * (Cmid + Cout)     # exp + rcp per GELU elem
    bytes_accessed = (4 * x_lane.size + 2 * m1.size + 2 * m2.size
                      + 4 * pool.size + 4 * 2 * (Cmid + Cout)
                      + 4 * BH * (W // 2) * Cout)

    operand_bytes = bytes_accessed
    scratch_bytes = 4 * (B * (H + 2) * W * Cin + B * (H + 2) * W * Cmid)
    vmem_limit = int(max(4 << 20, 2 * (operand_bytes + scratch_bytes)))

    vmem = pl.BlockSpec(memory_space=pltpu.MemorySpace.VMEM)
    y2d = pl.pallas_call(
        resnet_block_kernel,
        out_shape=jax.ShapeDtypeStruct((BH, (W // 2) * Cout), jnp.float32),
        in_specs=[vmem] * 8,
        out_specs=vmem,
        scratch_shapes=[
            pltpu.VMEM((B, H + 2, W * Cin), jnp.float32),   # padded input
            pltpu.VMEM((B, H + 2, W * Cmid), jnp.float32),  # padded mid act
        ],
        compiler_params=pltpu.CompilerParams(vmem_limit_bytes=vmem_limit),
        cost_estimate=pl.CostEstimate(flops=flops,
                                      transcendentals=transcendentals,
                                      bytes_accessed=bytes_accessed),
    )(x_lane, m1, m2, g1.reshape(1, -1), b1.reshape(1, -1),
      g2.reshape(1, -1), b2.reshape(1, -1), pool)

    y = y2d.reshape(B, H, W // 2, Cout)
    return jnp.transpose(y, (0, 3, 1, 2))            # NHWC -> NCHW


def init_params(key, cin=4, cmid=8, cout=4):
    k1, k2 = jax.random.split(key)
    # conv weights created in PyTorch OIHW layout, converted to HWIO (glue).
    w1_oihw = jax.random.normal(k1, (cmid, cin, 3, 3), jnp.float32) * 0.1
    w2_oihw = jax.random.normal(k2, (cout, cmid, 3, 3), jnp.float32) * 0.1
    w1 = jnp.transpose(w1_oihw, (2, 3, 1, 0))
    w2 = jnp.transpose(w2_oihw, (2, 3, 1, 0))
    # BatchNorm affine params at PyTorch default init (gamma=1, beta=0).
    g1, b1 = jnp.ones((cmid,), jnp.float32), jnp.zeros((cmid,), jnp.float32)
    g2, b2 = jnp.ones((cout,), jnp.float32), jnp.zeros((cout,), jnp.float32)
    return (w1, g1, b1, w2, g2, b2)


def reference_forward(x_nchw, params, matmul_dtype=jnp.float32):
    """Pure-JAX reference mirroring the PyTorch forward (training-mode BN).

    matmul_dtype=jnp.float32 reproduces the exact f32 PyTorch graph;
    matmul_dtype=jnp.bfloat16 mirrors the kernel's bf16 conv operands with
    f32 accumulation (the intentional MXU optimization)."""
    w1, g1, b1, w2, g2, b2 = params
    x = jnp.transpose(x_nchw, (0, 2, 3, 1)).astype(jnp.float32)

    def conv(h, w):
        return lax.conv_general_dilated(
            h.astype(matmul_dtype), w.astype(matmul_dtype), (1, 1),
            ((1, 1), (1, 1)), dimension_numbers=('NHWC', 'HWIO', 'NHWC'),
            preferred_element_type=jnp.float32)

    def bn(h, g, b):
        mean = jnp.mean(h, axis=(0, 1, 2), keepdims=True)
        var = jnp.mean((h - mean) ** 2, axis=(0, 1, 2), keepdims=True)
        return (h - mean) * lax.rsqrt(var + _BN_EPS) * g + b

    h = jax.nn.gelu(bn(conv(x, w1), g1, b1), approximate=False)
    h = bn(conv(h, w2), g2, b2) + x
    h = jax.nn.gelu(h, approximate=False)
    h = (h[:, :, 0::2, :] + h[:, :, 1::2, :]) * 0.5          # AvgPool2d((1,2))
    return jnp.transpose(h, (0, 3, 1, 2))


if __name__ == "__main__":
    key = jax.random.PRNGKey(0)
    kx, kp = jax.random.split(key)
    # input: (batch_size, n_channels, n_frames, n_freq) as in the PyTorch docstring
    x = jax.random.normal(kx, (2, 4, 16, 16), jnp.float32)
    params = init_params(kp, cin=4, cmid=8, cout=4)

    fwd = jax.jit(resnet_forward)
    out = jax.block_until_ready(fwd(x, params))
    assert out.shape == (2, 4, 16, 8), out.shape

    # Tight numerical gate vs a reference that mirrors the PyTorch graph with
    # the same bf16 conv operands / f32 accumulation the kernel uses.  (A pure
    # f32 reference_forward(x, params) matches PyTorch exactly; the bf16 MXU
    # operands deviate from it only by the expected ~1e-2-scale quantization.)
    ref = jax.block_until_ready(reference_forward(x, params, jnp.bfloat16))
    max_err = float(jnp.max(jnp.abs(out - ref)))
    assert jnp.allclose(out, ref, atol=2e-3, rtol=2e-3), max_err

    # TODO(synk): BatchNorm running_mean/running_var buffer updates are
    # training-side state, not part of the forward output; omitted.
    print("KERNEL_OK")
</pallas_src>

<mosaic_0001>
module attributes {stable_mosaic.version = 11 : i64} {
  func.func @resnet_block_kernel(%arg0: memref<2x16x64xf32, #tpu.memory_space<vmem>>, %arg1: memref<192x128xbf16, #tpu.memory_space<vmem>>, %arg2: memref<384x64xbf16, #tpu.memory_space<vmem>>, %arg3: memref<1x8xf32, #tpu.memory_space<vmem>>, %arg4: memref<1x8xf32, #tpu.memory_space<vmem>>, %arg5: memref<1x4xf32, #tpu.memory_space<vmem>>, %arg6: memref<1x4xf32, #tpu.memory_space<vmem>>, %arg7: memref<64x32xf32, #tpu.memory_space<vmem>>, %arg8: memref<32x32xf32, #tpu.memory_space<vmem>>, %arg9: memref<2x18x64xf32, #tpu.memory_space<vmem>>, %arg10: memref<2x18x128xf32, #tpu.memory_space<vmem>>) attributes {dimension_semantics = [], scalar_prefetch = 0 : i64, scratch_operands = 2 : i64, tpu.core_type = #tpu.core_type<tc>} {
    %cst = arith.constant 0.000000e+00 : f32
    %0 = vector.broadcast %cst : f32 to vector<2x1x64xf32>
    %c0 = arith.constant 0 : index
    %c0_0 = arith.constant 0 : index
    %c0_1 = arith.constant 0 : index
    %1 = vector.load %arg9[%c0, %c0_0, %c0_1] : memref<2x18x64xf32, #tpu.memory_space<vmem>>, vector<2x1x64xf32>
    tpu.vector_store %arg9[%c0, %c0_0, %c0_1], %0 {strides = array<i32>} : memref<2x18x64xf32, #tpu.memory_space<vmem>>, vector<2x1x64xf32>,
    %cst_2 = arith.constant 0.000000e+00 : f32
    %2 = vector.broadcast %cst_2 : f32 to vector<2x1x64xf32>
    %c0_3 = arith.constant 0 : index
    %c17 = arith.constant 17 : index
    %c0_4 = arith.constant 0 : index
    %3 = vector.load %arg9[%c0_3, %c17, %c0_4] : memref<2x18x64xf32, #tpu.memory_space<vmem>>, vector<2x1x64xf32>
    tpu.vector_store %arg9[%c0_3, %c17, %c0_4], %2 {strides = array<i32>} : memref<2x18x64xf32, #tpu.memory_space<vmem>>, vector<2x1x64xf32>,
    %c0_5 = arith.constant 0 : index
    %c0_6 = arith.constant 0 : index
    %c0_7 = arith.constant 0 : index
    %4 = vector.load %arg0[%c0_5, %c0_6, %c0_7] : memref<2x16x64xf32, #tpu.memory_space<vmem>>, vector<2x16x64xf32>
    %c0_8 = arith.constant 0 : index
    %c1 = arith.constant 1 : index
    %c0_9 = arith.constant 0 : index
    %5 = vector.load %arg9[%c0_8, %c1, %c0_9] : memref<2x18x64xf32, #tpu.memory_space<vmem>>, vector<2x16x64xf32>
    tpu.vector_store %arg9[%c0_8, %c1, %c0_9], %4 {strides = array<i32>} : memref<2x18x64xf32, #tpu.memory_space<vmem>>, vector<2x16x64xf32>,
    %cst_10 = arith.constant 0.000000e+00 : f32
    %6 = vector.broadcast %cst_10 : f32 to vector<2x1x128xf32>
    %c0_11 = arith.constant 0 : index
    %c0_12 = arith.constant 0 : index
    %c0_13 = arith.constant 0 : index
    %7 = vector.load %arg10[%c0_11, %c0_12, %c0_13] : memref<2x18x128xf32, #tpu.memory_space<vmem>>, vector<2x1x128xf32>
    tpu.vector_store %arg10[%c0_11, %c0_12, %c0_13], %6 {strides = array<i32>} : memref<2x18x128xf32, #tpu.memory_space<vmem>>, vector<2x1x128xf32>,
    %cst_14 = arith.constant 0.000000e+00 : f32
    %8 = vector.broadcast %cst_14 : f32 to vector<2x1x128xf32>
    %c0_15 = arith.constant 0 : index
    %c17_16 = arith.constant 17 : index
    %c0_17 = arith.constant 0 : index
    %9 = vector.load %arg10[%c0_15, %c17_16, %c0_17] : memref<2x18x128xf32, #tpu.memory_space<vmem>>, vector<2x1x128xf32>
    tpu.vector_store %arg10[%c0_15, %c17_16, %c0_17], %8 {strides = array<i32>} : memref<2x18x128xf32, #tpu.memory_space<vmem>>, vector<2x1x128xf32>,
    %c0_18 = arith.constant 0 : index
    %c0_19 = arith.constant 0 : index
    %c0_20 = arith.constant 0 : index
    %10 = vector.load %arg9[%c0_18, %c0_19, %c0_20] : memref<2x18x64xf32, #tpu.memory_space<vmem>>, vector<2x16x64xf32>
    %11 = vector.shape_cast %10 : vector<2x16x64xf32> to vector<32x64xf32>
    %c0_21 = arith.constant 0 : index
    %c1_22 = arith.constant 1 : index
    %c0_23 = arith.constant 0 : index
    %12 = vector.load %arg9[%c0_21, %c1_22, %c0_23] : memref<2x18x64xf32, #tpu.memory_space<vmem>>, vector<2x16x64xf32>
    %13 = vector.shape_cast %12 : vector<2x16x64xf32> to vector<32x64xf32>
    %c0_24 = arith.constant 0 : index
    %c2 = arith.constant 2 : index
    %c0_25 = arith.constant 0 : index
    %14 = vector.load %arg9[%c0_24, %c2, %c0_25] : memref<2x18x64xf32, #tpu.memory_space<vmem>>, vector<2x16x64xf32>
    %15 = vector.shape_cast %14 : vector<2x16x64xf32> to vector<32x64xf32>
    %16 = tpu.concatenate %11, %13, %15 in 1 : vector<32x64xf32>, vector<32x64xf32>, vector<32x64xf32> -> vector<32x192xf32>
    %17 = arith.truncf %16 : vector<32x192xf32> to vector<32x192xbf16>
    %c0_26 = arith.constant 0 : index
    %c0_27 = arith.constant 0 : index
    %18 = vector.load %arg1[%c0_26, %c0_27] : memref<192x128xbf16, #tpu.memory_space<vmem>>, vector<192x128xbf16>
    %cst_28 = arith.constant dense<0.000000e+00> : vector<32x128xf32>
    %19 = tpu.matmul %17, %18, %cst_28 {dimension_numbers = #tpu.dot_dimension_numbers<[1], [0], [0], [1], [0, 0, 1, 1], [], []>} : vector<32x192xbf16>, vector<192x128xbf16>, vector<32x128xf32> -> vector<32x128xf32>
    %cst_29 = arith.constant dense<0.000000e+00> : vector<128xf32>
    %20 = vector.multi_reduction <add>, %19, %cst_29 [0] : vector<32x128xf32> to vector<128xf32>
    %21 = vector.shape_cast %20 : vector<128xf32> to vector<1x128xf32>
    %22 = vector.extract_strided_slice %21 {offsets = [0, 0], sizes = [1, 64], strides = [1, 1]} : vector<1x128xf32> to vector<1x64xf32>
    %23 = vector.extract_strided_slice %21 {offsets = [0, 64], sizes = [1, 64], strides = [1, 1]} : vector<1x128xf32> to vector<1x64xf32>
    %24 = arith.addf %22, %23 : vector<1x64xf32>
    %25 = vector.extract_strided_slice %24 {offsets = [0, 0], sizes = [1, 32], strides = [1, 1]} : vector<1x64xf32> to vector<1x32xf32>
    %26 = vector.extract_strided_slice %24 {offsets = [0, 32], sizes = [1, 32], strides = [1, 1]} : vector<1x64xf32> to vector<1x32xf32>
    %27 = arith.addf %25, %26 : vector<1x32xf32>
    %28 = vector.extract_strided_slice %27 {offsets = [0, 0], sizes = [1, 16], strides = [1, 1]} : vector<1x32xf32> to vector<1x16xf32>
    %29 = vector.extract_strided_slice %27 {offsets = [0, 16], sizes = [1, 16], strides = [1, 1]} : vector<1x32xf32> to vector<1x16xf32>
    %30 = arith.addf %28, %29 : vector<1x16xf32>
    %31 = vector.extract_strided_slice %30 {offsets = [0, 0], sizes = [1, 8], strides = [1, 1]} : vector<1x16xf32> to vector<1x8xf32>
    %32 = vector.extract_strided_slice %30 {offsets = [0, 8], sizes = [1, 8], strides = [1, 1]} : vector<1x16xf32> to vector<1x8xf32>
    %33 = arith.addf %31, %32 : vector<1x8xf32>
    %cst_30 = arith.constant 0.001953125 : f32
    %34 = vector.broadcast %cst_30 : f32 to vector<1x8xf32>
    %35 = arith.mulf %33, %34 : vector<1x8xf32>
    %36 = tpu.concatenate %35, %35 in 1 : vector<1x8xf32>, vector<1x8xf32> -> vector<1x16xf32>
    %37 = tpu.concatenate %36, %36 in 1 : vector<1x16xf32>, vector<1x16xf32> -> vector<1x32xf32>
    %38 = tpu.concatenate %37, %37 in 1 : vector<1x32xf32>, vector<1x32xf32> -> vector<1x64xf32>
    %39 = tpu.concatenate %38, %38 in 1 : vector<1x64xf32>, vector<1x64xf32> -> vector<1x128xf32>
    %40 = vector.broadcast %39 : vector<1x128xf32> to vector<32x128xf32>
    %41 = arith.subf %19, %40 : vector<32x128xf32>
    %42 = arith.mulf %41, %41 : vector<32x128xf32>
    %cst_31 = arith.constant dense<0.000000e+00> : vector<128xf32>
    %43 = vector.multi_reduction <add>, %42, %cst_31 [0] : vector<32x128xf32> to vector<128xf32>
    %44 = vector.shape_cast %43 : vector<128xf32> to vector<1x128xf32>
    %45 = vector.extract_strided_slice %44 {offsets = [0, 0], sizes = [1, 64], strides = [1, 1]} : vector<1x128xf32> to vector<1x64xf32>
    %46 = vector.extract_strided_slice %44 {offsets = [0, 64], sizes = [1, 64], strides = [1, 1]} : vector<1x128xf32> to vector<1x64xf32>
    %47 = arith.addf %45, %46 : vector<1x64xf32>
    %48 = vector.extract_strided_slice %47 {offsets = [0, 0], sizes = [1, 32], strides = [1, 1]} : vector<1x64xf32> to vector<1x32xf32>
    %49 = vector.extract_strided_slice %47 {offsets = [0, 32], sizes = [1, 32], strides = [1, 1]} : vector<1x64xf32> to vector<1x32xf32>
    %50 = arith.addf %48, %49 : vector<1x32xf32>
    %51 = vector.extract_strided_slice %50 {offsets = [0, 0], sizes = [1, 16], strides = [1, 1]} : vector<1x32xf32> to vector<1x16xf32>
    %52 = vector.extract_strided_slice %50 {offsets = [0, 16], sizes = [1, 16], strides = [1, 1]} : vector<1x32xf32> to vector<1x16xf32>
    %53 = arith.addf %51, %52 : vector<1x16xf32>
    %54 = vector.extract_strided_slice %53 {offsets = [0, 0], sizes = [1, 8], strides = [1, 1]} : vector<1x16xf32> to vector<1x8xf32>
    %55 = vector.extract_strided_slice %53 {offsets = [0, 8], sizes = [1, 8], strides = [1, 1]} : vector<1x16xf32> to vector<1x8xf32>
    %56 = arith.addf %54, %55 : vector<1x8xf32>
    %cst_32 = arith.constant 0.001953125 : f32
    %57 = vector.broadcast %cst_32 : f32 to vector<1x8xf32>
    %58 = arith.mulf %56, %57 : vector<1x8xf32>
    %c0_33 = arith.constant 0 : index
    %c0_34 = arith.constant 0 : index
    %59 = vector.load %arg3[%c0_33, %c0_34] : memref<1x8xf32, #tpu.memory_space<vmem>>, vector<1x8xf32>
    %cst_35 = arith.constant 9.99999974E-6 : f32
    %60 = vector.broadcast %cst_35 : f32 to vector<1x8xf32>
    %61 = arith.addf %58, %60 : vector<1x8xf32>
    %62 = math.rsqrt %61 : vector<1x8xf32>
    %63 = arith.mulf %59, %62 : vector<1x8xf32>
    %c0_36 = arith.constant 0 : index
    %c0_37 = arith.constant 0 : index
    %64 = vector.load %arg4[%c0_36, %c0_37] : memref<1x8xf32, #tpu.memory_space<vmem>>, vector<1x8xf32>
    %65 = arith.mulf %35, %63 : vector<1x8xf32>
    %66 = arith.subf %64, %65 : vector<1x8xf32>
    %67 = tpu.concatenate %63, %66 in 0 : vector<1x8xf32>, vector<1x8xf32> -> vector<2x8xf32>
    %68 = tpu.concatenate %67, %67 in 1 : vector<2x8xf32>, vector<2x8xf32> -> vector<2x16xf32>
    %69 = tpu.concatenate %68, %68 in 1 : vector<2x16xf32>, vector<2x16xf32> -> vector<2x32xf32>
    %70 = tpu.concatenate %69, %69 in 1 : vector<2x32xf32>, vector<2x32xf32> -> vector<2x64xf32>
    %71 = tpu.concatenate %70, %70 in 1 : vector<2x64xf32>, vector<2x64xf32> -> vector<2x128xf32>
    %72 = vector.extract_strided_slice %71 {offsets = [0, 0], sizes = [1, 128], strides = [1, 1]} : vector<2x128xf32> to vector<1x128xf32>
    %73 = vector.extract_strided_slice %71 {offsets = [1, 0], sizes = [1, 128], strides = [1, 1]} : vector<2x128xf32> to vector<1x128xf32>
    %74 = vector.broadcast %72 : vector<1x128xf32> to vector<32x128xf32>
    %75 = arith.mulf %19, %74 : vector<32x128xf32>
    %76 = vector.broadcast %73 : vector<1x128xf32> to vector<32x128xf32>
    %77 = arith.addf %75, %76 : vector<32x128xf32>
    %cst_38 = arith.constant 5.000000e-01 : f32
    %78 = vector.broadcast %cst_38 : f32 to vector<32x128xf32>
    %79 = arith.mulf %78, %77 : vector<32x128xf32>
    %cst_39 = arith.constant 0.707106769 : f32
    %80 = vector.broadcast %cst_39 : f32 to vector<32x128xf32>
    %81 = arith.mulf %77, %80 : vector<32x128xf32>
    %cst_40 = arith.constant 0.000000e+00 : f32
    %82 = vector.broadcast %cst_40 : f32 to vector<32x128xf32>
    %83 = arith.cmpf olt, %81, %82 : vector<32x128xf32>
    %cst_41 = arith.constant -1.000000e+00 : f32
    %cst_42 = arith.constant 1.000000e+00 : f32
    %84 = vector.broadcast %cst_41 : f32 to vector<32x128xf32>
    %85 = vector.broadcast %cst_42 : f32 to vector<32x128xf32>
    %86 = arith.select %83, %84, %85 : vector<32x128xi1>, vector<32x128xf32>
    %87 = math.absf %81 : vector<32x128xf32>
    %cst_43 = arith.constant 0.327591091 : f32
    %88 = vector.broadcast %cst_43 : f32 to vector<32x128xf32>
    %89 = arith.mulf %88, %87 : vector<32x128xf32>
    %cst_44 = arith.constant 1.000000e+00 : f32
    %90 = vector.broadcast %cst_44 : f32 to vector<32x128xf32>
    %91 = arith.addf %90, %89 : vector<32x128xf32>
    %92 = tpu.reciprocal %91 {approx = true} : vector<32x128xf32> -> vector<32x128xf32>
    %93 = arith.mulf %91, %92 : vector<32x128xf32>
    %cst_45 = arith.constant 2.000000e+00 : f32
    %94 = vector.broadcast %cst_45 : f32 to vector<32x128xf32>
    %95 = arith.subf %94, %93 : vector<32x128xf32>
    %96 = arith.mulf %92, %95 : vector<32x128xf32>
    %cst_46 = arith.constant 1.06140542 : f32
    %97 = vector.broadcast %cst_46 : f32 to vector<32x128xf32>
    %98 = arith.mulf %97, %96 : vector<32x128xf32>
    %cst_47 = arith.constant -1.45315206 : f32
    %99 = vector.broadcast %cst_47 : f32 to vector<32x128xf32>
    %100 = arith.addf %98, %99 : vector<32x128xf32>
    %101 = arith.mulf %100, %96 : vector<32x128xf32>
    %cst_48 = arith.constant 1.42141378 : f32
    %102 = vector.broadcast %cst_48 : f32 to vector<32x128xf32>
    %103 = arith.addf %101, %102 : vector<32x128xf32>
    %104 = arith.mulf %103, %96 : vector<32x128xf32>
    %cst_49 = arith.constant -0.284496725 : f32
    %105 = vector.broadcast %cst_49 : f32 to vector<32x128xf32>
    %106 = arith.addf %104, %105 : vector<32x128xf32>
    %107 = arith.mulf %106, %96 : vector<32x128xf32>
    %cst_50 = arith.constant 0.254829586 : f32
    %108 = vector.broadcast %cst_50 : f32 to vector<32x128xf32>
    %109 = arith.addf %107, %108 : vector<32x128xf32>
    %110 = arith.mulf %109, %96 : vector<32x128xf32>
    %cst_51 = arith.constant 0.000000e+00 : f32
    %111 = vector.broadcast %cst_51 : f32 to vector<32x128xf32>
    %112 = arith.subf %111, %87 : vector<32x128xf32>
    %113 = arith.mulf %112, %87 : vector<32x128xf32>
    %114 = math.exp %113 : vector<32x128xf32>
    %115 = arith.mulf %110, %114 : vector<32x128xf32>
    %cst_52 = arith.constant 1.000000e+00 : f32
    %116 = vector.broadcast %cst_52 : f32 to vector<32x128xf32>
    %117 = arith.subf %116, %115 : vector<32x128xf32>
    %118 = arith.mulf %86, %117 : vector<32x128xf32>
    %cst_53 = arith.constant 1.000000e+00 : f32
    %119 = vector.broadcast %cst_53 : f32 to vector<32x128xf32>
    %120 = arith.addf %119, %118 : vector<32x128xf32>
    %121 = arith.mulf %79, %120 : vector<32x128xf32>
    %122 = vector.shape_cast %121 : vector<32x128xf32> to vector<2x16x128xf32>
    %c0_54 = arith.constant 0 : index
    %c1_55 = arith.constant 1 : index
    %c0_56 = arith.constant 0 : index
    %123 = vector.load %arg10[%c0_54, %c1_55, %c0_56] : memref<2x18x128xf32, #tpu.memory_space<vmem>>, vector<2x16x128xf32>
    tpu.vector_store %arg10[%c0_54, %c1_55, %c0_56], %122 {strides = array<i32>} : memref<2x18x128xf32, #tpu.memory_space<vmem>>, vector<2x16x128xf32>,
    %c0_57 = arith.constant 0 : index
    %c0_58 = arith.constant 0 : index
    %c0_59 = arith.constant 0 : index
    %124 = vector.load %arg10[%c0_57, %c0_58, %c0_59] : memref<2x18x128xf32, #tpu.memory_space<vmem>>, vector<2x16x128xf32>
    %125 = vector.shape_cast %124 : vector<2x16x128xf32> to vector<32x128xf32>
    %c0_60 = arith.constant 0 : index
    %c1_61 = arith.constant 1 : index
    %c0_62 = arith.constant 0 : index
    %126 = vector.load %arg10[%c0_60, %c1_61, %c0_62] : memref<2x18x128xf32, #tpu.memory_space<vmem>>, vector<2x16x128xf32>
    %127 = vector.shape_cast %126 : vector<2x16x128xf32> to vector<32x128xf32>
    %c0_63 = arith.constant 0 : index
    %c2_64 = arith.constant 2 : index
    %c0_65 = arith.constant 0 : index
    %128 = vector.load %arg10[%c0_63, %c2_64, %c0_65] : memref<2x18x128xf32, #tpu.memory_space<vmem>>, vector<2x16x128xf32>
    %129 = vector.shape_cast %128 : vector<2x16x128xf32> to vector<32x128xf32>
    %130 = tpu.concatenate %125, %127, %129 in 1 : vector<32x128xf32>, vector<32x128xf32>, vector<32x128xf32> -> vector<32x384xf32>
    %131 = arith.truncf %130 : vector<32x384xf32> to vector<32x384xbf16>
    %c0_66 = arith.constant 0 : index
    %c0_67 = arith.constant 0 : index
    %132 = vector.load %arg2[%c0_66, %c0_67] : memref<384x64xbf16, #tpu.memory_space<vmem>>, vector<384x64xbf16>
    %cst_68 = arith.constant dense<0.000000e+00> : vector<32x64xf32>
    %133 = tpu.matmul %131, %132, %cst_68 {dimension_numbers = #tpu.dot_dimension_numbers<[1], [0], [0], [1], [0, 0, 1, 1], [], []>} : vector<32x384xbf16>, vector<384x64xbf16>, vector<32x64xf32> -> vector<32x64xf32>
    %cst_69 = arith.constant dense<0.000000e+00> : vector<64xf32>
    %134 = vector.multi_reduction <add>, %133, %cst_69 [0] : vector<32x64xf32> to vector<64xf32>
    %135 = vector.shape_cast %134 : vector<64xf32> to vector<1x64xf32>
    %136 = vector.extract_strided_slice %135 {offsets = [0, 0], sizes = [1, 32], strides = [1, 1]} : vector<1x64xf32> to vector<1x32xf32>
    %137 = vector.extract_strided_slice %135 {offsets = [0, 32], sizes = [1, 32], strides = [1, 1]} : vector<1x64xf32> to vector<1x32xf32>
    %138 = arith.addf %136, %137 : vector<1x32xf32>
    %139 = vector.extract_strided_slice %138 {offsets = [0, 0], sizes = [1, 16], strides = [1, 1]} : vector<1x32xf32> to vector<1x16xf32>
    %140 = vector.extract_strided_slice %138 {offsets = [0, 16], sizes = [1, 16], strides = [1, 1]} : vector<1x32xf32> to vector<1x16xf32>
    %141 = arith.addf %139, %140 : vector<1x16xf32>
    %142 = vector.extract_strided_slice %141 {offsets = [0, 0], sizes = [1, 8], strides = [1, 1]} : vector<1x16xf32> to vector<1x8xf32>
    %143 = vector.extract_strided_slice %141 {offsets = [0, 8], sizes = [1, 8], strides = [1, 1]} : vector<1x16xf32> to vector<1x8xf32>
    %144 = arith.addf %142, %143 : vector<1x8xf32>
    %145 = vector.extract_strided_slice %144 {offsets = [0, 0], sizes = [1, 4], strides = [1, 1]} : vector<1x8xf32> to vector<1x4xf32>
    %146 = vector.extract_strided_slice %144 {offsets = [0, 4], sizes = [1, 4], strides = [1, 1]} : vector<1x8xf32> to vector<1x4xf32>
    %147 = arith.addf %145, %146 : vector<1x4xf32>
    %cst_70 = arith.constant 0.001953125 : f32
    %148 = vector.broadcast %cst_70 : f32 to vector<1x4xf32>
    %149 = arith.mulf %147, %148 : vector<1x4xf32>
    %150 = tpu.concatenate %149, %149 in 1 : vector<1x4xf32>, vector<1x4xf32> -> vector<1x8xf32>
    %151 = tpu.concatenate %150, %150 in 1 : vector<1x8xf32>, vector<1x8xf32> -> vector<1x16xf32>
    %152 = tpu.concatenate %151, %151 in 1 : vector<1x16xf32>, vector<1x16xf32> -> vector<1x32xf32>
    %153 = tpu.concatenate %152, %152 in 1 : vector<1x32xf32>, vector<1x32xf32> -> vector<1x64xf32>
    %154 = vector.broadcast %153 : vector<1x64xf32> to vector<32x64xf32>
    %155 = arith.subf %133, %154 : vector<32x64xf32>
    %156 = arith.mulf %155, %155 : vector<32x64xf32>
    %cst_71 = arith.constant dense<0.000000e+00> : vector<64xf32>
    %157 = vector.multi_reduction <add>, %156, %cst_71 [0] : vector<32x64xf32> to vector<64xf32>
    %158 = vector.shape_cast %157 : vector<64xf32> to vector<1x64xf32>
    %159 = vector.extract_strided_slice %158 {offsets = [0, 0], sizes = [1, 32], strides = [1, 1]} : vector<1x64xf32> to vector<1x32xf32>
    %160 = vector.extract_strided_slice %158 {offsets = [0, 32], sizes = [1, 32], strides = [1, 1]} : vector<1x64xf32> to vector<1x32xf32>
    %161 = arith.addf %159, %160 : vector<1x32xf32>
    %162 = vector.extract_strided_slice %161 {offsets = [0, 0], sizes = [1, 16], strides = [1, 1]} : vector<1x32xf32> to vector<1x16xf32>
    %163 = vector.extract_strided_slice %161 {offsets = [0, 16], sizes = [1, 16], strides = [1, 1]} : vector<1x32xf32> to vector<1x16xf32>
    %164 = arith.addf %162, %163 : vector<1x16xf32>
    %165 = vector.extract_strided_slice %164 {offsets = [0, 0], sizes = [1, 8], strides = [1, 1]} : vector<1x16xf32> to vector<1x8xf32>
    %166 = vector.extract_strided_slice %164 {offsets = [0, 8], sizes = [1, 8], strides = [1, 1]} : vector<1x16xf32> to vector<1x8xf32>
    %167 = arith.addf %165, %166 : vector<1x8xf32>
    %168 = vector.extract_strided_slice %167 {offsets = [0, 0], sizes = [1, 4], strides = [1, 1]} : vector<1x8xf32> to vector<1x4xf32>
    %169 = vector.extract_strided_slice %167 {offsets = [0, 4], sizes = [1, 4], strides = [1, 1]} : vector<1x8xf32> to vector<1x4xf32>
    %170 = arith.addf %168, %169 : vector<1x4xf32>
    %cst_72 = arith.constant 0.001953125 : f32
    %171 = vector.broadcast %cst_72 : f32 to vector<1x4xf32>
    %172 = arith.mulf %170, %171 : vector<1x4xf32>
    %c0_73 = arith.constant 0 : index
    %c0_74 = arith.constant 0 : index
    %173 = vector.load %arg5[%c0_73, %c0_74] : memref<1x4xf32, #tpu.memory_space<vmem>>, vector<1x4xf32>
    %cst_75 = arith.constant 9.99999974E-6 : f32
    %174 = vector.broadcast %cst_75 : f32 to vector<1x4xf32>
    %175 = arith.addf %172, %174 : vector<1x4xf32>
    %176 = math.rsqrt %175 : vector<1x4xf32>
    %177 = arith.mulf %173, %176 : vector<1x4xf32>
    %c0_76 = arith.constant 0 : index
    %c0_77 = arith.constant 0 : index
    %178 = vector.load %arg6[%c0_76, %c0_77] : memref<1x4xf32, #tpu.memory_space<vmem>>, vector<1x4xf32>
    %179 = arith.mulf %149, %177 : vector<1x4xf32>
    %180 = arith.subf %178, %179 : vector<1x4xf32>
    %181 = tpu.concatenate %177, %180 in 0 : vector<1x4xf32>, vector<1x4xf32> -> vector<2x4xf32>
    %182 = tpu.concatenate %181, %181 in 1 : vector<2x4xf32>, vector<2x4xf32> -> vector<2x8xf32>
    %183 = tpu.concatenate %182, %182 in 1 : vector<2x8xf32>, vector<2x8xf32> -> vector<2x16xf32>
    %184 = tpu.concatenate %183, %183 in 1 : vector<2x16xf32>, vector<2x16xf32> -> vector<2x32xf32>
    %185 = tpu.concatenate %184, %184 in 1 : vector<2x32xf32>, vector<2x32xf32> -> vector<2x64xf32>
    %186 = vector.extract_strided_slice %185 {offsets = [0, 0], sizes = [1, 64], strides = [1, 1]} : vector<2x64xf32> to vector<1x64xf32>
    %187 = vector.extract_strided_slice %185 {offsets = [1, 0], sizes = [1, 64], strides = [1, 1]} : vector<2x64xf32> to vector<1x64xf32>
    %188 = vector.broadcast %186 : vector<1x64xf32> to vector<32x64xf32>
    %189 = arith.mulf %133, %188 : vector<32x64xf32>
    %190 = vector.broadcast %187 : vector<1x64xf32> to vector<32x64xf32>
    %191 = arith.addf %189, %190 : vector<32x64xf32>
    %c0_78 = arith.constant 0 : index
    %c0_79 = arith.constant 0 : index
    %c0_80 = arith.constant 0 : index
    %192 = vector.load %arg0[%c0_78, %c0_79, %c0_80] : memref<2x16x64xf32, #tpu.memory_space<vmem>>, vector<2x16x64xf32>
    %193 = vector.shape_cast %192 : vector<2x16x64xf32> to vector<32x64xf32>
    %194 = arith.addf %191, %193 : vector<32x64xf32>
    %cst_81 = arith.constant 5.000000e-01 : f32
    %195 = vector.broadcast %cst_81 : f32 to vector<32x64xf32>
    %196 = arith.mulf %195, %194 : vector<32x64xf32>
    %cst_82 = arith.constant 0.707106769 : f32
    %197 = vector.broadcast %cst_82 : f32 to vector<32x64xf32>
    %198 = arith.mulf %194, %197 : vector<32x64xf32>
    %cst_83 = arith.constant 0.000000e+00 : f32
    %199 = vector.broadcast %cst_83 : f32 to vector<32x64xf32>
    %200 = arith.cmpf olt, %198, %199 : vector<32x64xf32>
    %cst_84 = arith.constant -1.000000e+00 : f32
    %cst_85 = arith.constant 1.000000e+00 : f32
    %201 = vector.broadcast %cst_84 : f32 to vector<32x64xf32>
    %202 = vector.broadcast %cst_85 : f32 to vector<32x64xf32>
    %203 = arith.select %200, %201, %202 : vector<32x64xi1>, vector<32x64xf32>
    %204 = math.absf %198 : vector<32x64xf32>
    %cst_86 = arith.constant 0.327591091 : f32
    %205 = vector.broadcast %cst_86 : f32 to vector<32x64xf32>
    %206 = arith.mulf %205, %204 : vector<32x64xf32>
    %cst_87 = arith.constant 1.000000e+00 : f32
    %207 = vector.broadcast %cst_87 : f32 to vector<32x64xf32>
    %208 = arith.addf %207, %206 : vector<32x64xf32>
    %209 = tpu.reciprocal %208 {approx = true} : vector<32x64xf32> -> vector<32x64xf32>
    %210 = arith.mulf %208, %209 : vector<32x64xf32>
    %cst_88 = arith.constant 2.000000e+00 : f32
    %211 = vector.broadcast %cst_88 : f32 to vector<32x64xf32>
    %212 = arith.subf %211, %210 : vector<32x64xf32>
    %213 = arith.mulf %209, %212 : vector<32x64xf32>
    %cst_89 = arith.constant 1.06140542 : f32
    %214 = vector.broadcast %cst_89 : f32 to vector<32x64xf32>
    %215 = arith.mulf %214, %213 : vector<32x64xf32>
    %cst_90 = arith.constant -1.45315206 : f32
    %216 = vector.broadcast %cst_90 : f32 to vector<32x64xf32>
    %217 = arith.addf %215, %216 : vector<32x64xf32>
    %218 = arith.mulf %217, %213 : vector<32x64xf32>
    %cst_91 = arith.constant 1.42141378 : f32
    %219 = vector.broadcast %cst_91 : f32 to vector<32x64xf32>
    %220 = arith.addf %218, %219 : vector<32x64xf32>
    %221 = arith.mulf %220, %213 : vector<32x64xf32>
    %cst_92 = arith.constant -0.284496725 : f32
    %222 = vector.broadcast %cst_92 : f32 to vector<32x64xf32>
    %223 = arith.addf %221, %222 : vector<32x64xf32>
    %224 = arith.mulf %223, %213 : vector<32x64xf32>
    %cst_93 = arith.constant 0.254829586 : f32
    %225 = vector.broadcast %cst_93 : f32 to vector<32x64xf32>
    %226 = arith.addf %224, %225 : vector<32x64xf32>
    %227 = arith.mulf %226, %213 : vector<32x64xf32>
    %cst_94 = arith.constant 0.000000e+00 : f32
    %228 = vector.broadcast %cst_94 : f32 to vector<32x64xf32>
    %229 = arith.subf %228, %204 : vector<32x64xf32>
    %230 = arith.mulf %229, %204 : vector<32x64xf32>
    %231 = math.exp %230 : vector<32x64xf32>
    %232 = arith.mulf %227, %231 : vector<32x64xf32>
    %cst_95 = arith.constant 1.000000e+00 : f32
    %233 = vector.broadcast %cst_95 : f32 to vector<32x64xf32>
    %234 = arith.subf %233, %232 : vector<32x64xf32>
    %235 = arith.mulf %203, %234 : vector<32x64xf32>
    %cst_96 = arith.constant 1.000000e+00 : f32
    %236 = vector.broadcast %cst_96 : f32 to vector<32x64xf32>
    %237 = arith.addf %236, %235 : vector<32x64xf32>
    %238 = arith.mulf %196, %237 : vector<32x64xf32>
    %c0_97 = arith.constant 0 : index
    %c0_98 = arith.constant 0 : index
    %239 = vector.load %arg7[%c0_97, %c0_98] : memref<64x32xf32, #tpu.memory_space<vmem>>, vector<64x32xf32>
    %cst_99 = arith.constant dense<0.000000e+00> : vector<32x32xf32>
    %240 = tpu.matmul %238, %239, %cst_99 {dimension_numbers = #tpu.dot_dimension_numbers<[1], [0], [0], [1], [0, 0, 1, 1], [], []>} : vector<32x64xf32>, vector<64x32xf32>, vector<32x32xf32> -> vector<32x32xf32>
    %c0_100 = arith.constant 0 : index
    %c0_101 = arith.constant 0 : index
    %241 = vector.load %arg8[%c0_100, %c0_101] : memref<32x32xf32, #tpu.memory_space<vmem>>, vector<32x32xf32>
    tpu.vector_store %arg8[%c0_100, %c0_101], %240 {strides = array<i32>} : memref<32x32xf32, #tpu.memory_space<vmem>>, vector<32x32xf32>,
    return
  }
}

</mosaic_0001>

<llo_original>
// kernel: resnet_forward.1
$region0: #{resnet_forward.1}
  #allocation0 [shape = 'u32[]', space=smem, size = 0x4, offset = 0x4, fixed_abs, tag = 'smem constant byte address 0x4 - core index']
  #allocation1 [shape = 'u32[144,128]{1,0:T(1,128)}', space=vmem, size = 0x12000, scoped, tag = 'internal scratch']
  #allocation2 [shape = 'f32[2,18,64]{2,1,0:T(8,128)}', space=vmem, size = 0x6000, scoped, tag = 'scratch operand']
  #allocation3 [shape = 'f32[2,18,128]{2,1,0:T(8,128)}', space=vmem, size = 0x6000, scoped, tag = 'scratch operand']
  %s0 = inlined_call_operand.vmem [shape: f32[2,16,64], index: 0, kind: input, shape index: {}]
  %s1 = inlined_call_operand.vmem [shape: bf16[192,128], index: 1, kind: input, shape index: {}]
  %s2 = inlined_call_operand.vmem [shape: bf16[384,64], index: 2, kind: input, shape index: {}]
  %s3 = inlined_call_operand.vmem [shape: f32[1,8], index: 3, kind: input, shape index: {}]
  %s4 = inlined_call_operand.vmem [shape: f32[1,8], index: 4, kind: input, shape index: {}]
  %s5 = inlined_call_operand.vmem [shape: f32[1,4], index: 5, kind: input, shape index: {}]
  %s6 = inlined_call_operand.vmem [shape: f32[1,4], index: 6, kind: input, shape index: {}]
  %s7 = inlined_call_operand.vmem [shape: f32[64,32], index: 7, kind: input, shape index: {}]
  %s8 = inlined_call_operand.vmem [shape: f32[32,32], index: 8, kind: output, shape index: {}]
  %s9 = sld [smem:[#allocation0]]
  $region42: #{resnet_forward.1} parent=0
    _
  %s11 = ssub.s32 1, %s9
  %s12 = scalar_select 0, %s11, %s9
  // Predicated region
  $region2: #{resnet_forward.1} parent=0 // pred_check
    _
  $region3: #{resnet_forward.1} parent=0 // pred_check_branch
    %14 = sbr.rel (0) target = $region5
  $region4: #{resnet_forward.1} parent=0 // pred_region
    _
  $region5: #{resnet_forward.1} parent=0 // pred_fallthru
    _
  // Predicated region
  $region6: #{resnet_forward.1} parent=0 // pred_check
    _
  $region7: #{resnet_forward.1} parent=0 // pred_check_branch
    %16 = sbr.rel (0) target = $region9
  $region8: #{resnet_forward.1} parent=0 // pred_region
    _
  $region9: #{resnet_forward.1} parent=0 // pred_fallthru
    _
  // Predicated region
  $region10: #{resnet_forward.1} parent=0 // pred_check
    _
  $region11: #{resnet_forward.1} parent=0 // pred_check_branch
    %18 = sbr.rel (0) target = $region13
  $region12: #{resnet_forward.1} parent=0 // pred_region
    _
  $region13: #{resnet_forward.1} parent=0 // pred_fallthru
    _
  // Predicated region
  $region14: #{resnet_forward.1} parent=0 // pred_check
    _
  $region15: #{resnet_forward.1} parent=0 // pred_check_branch
    %20 = sbr.rel (0) target = $region17
  $region16: #{resnet_forward.1} parent=0 // pred_region
    _
  $region17: #{resnet_forward.1} parent=0 // pred_fallthru
    _
  // Predicated region
  $region18: #{resnet_forward.1} parent=0 // pred_check
    _
  $region19: #{resnet_forward.1} parent=0 // pred_check_branch
    %22 = sbr.rel (0) target = $region21
  $region20: #{resnet_forward.1} parent=0 // pred_region
    _
  $region21: #{resnet_forward.1} parent=0 // pred_fallthru
    _
  // Predicated region
  $region22: #{resnet_forward.1} parent=0 // pred_check
    _
  $region23: #{resnet_forward.1} parent=0 // pred_check_branch
    %24 = sbr.rel (0) target = $region25
  $region24: #{resnet_forward.1} parent=0 // pred_region
    _
  $region25: #{resnet_forward.1} parent=0 // pred_fallthru
    _
  // Predicated region
  $region26: #{resnet_forward.1} parent=0 // pred_check
    _
  $region27: #{resnet_forward.1} parent=0 // pred_check_branch
    %26 = sbr.rel (0) target = $region29
  $region28: #{resnet_forward.1} parent=0 // pred_region
    _
  $region29: #{resnet_forward.1} parent=0 // pred_fallthru
    _
  // Predicated region
  $region30: #{resnet_forward.1} parent=0 // pred_check
    _
  $region31: #{resnet_forward.1} parent=0 // pred_check_branch
    %28 = sbr.rel (0) target = $region33
  $region32: #{resnet_forward.1} parent=0 // pred_region
    _
  $region33: #{resnet_forward.1} parent=0 // pred_fallthru
    _
  %vm30 = vcmask 516096
  %31 = vst.msk [vmem:[#allocation2] sm:$0x1] %vm30, 0.0
  %32 = vst.msk [vmem:[#allocation2 + $0x18] sm:$0x1] %vm30, 0.0
  %33 = vst.msk [vmem:[#allocation2 + $0x11] sm:$0x1] %vm30, 0.0
  %34 = vst.msk [vmem:[#allocation2 + $0x29] sm:$0x1] %vm30, 0.0
  %v35 = vld [vmem:[%s0] sm:$0xff]
  %v36 = vld [vmem:[%s0 + $0x8] sm:$0xff]
  %v37 = vld [vmem:[%s0 + $0x10] sm:$0xff]
  %v38 = vld [vmem:[%s0 + $0x18] sm:$0xff]
  %vm39 = vcmask 523264
  %40 = vst.msk [vmem:[#allocation2 + $0x1] sm:$0xff] %vm39, %v35
  %41 = vst.msk [vmem:[#allocation2 + $0x9] sm:$0xff] %vm39, %v36
  %42 = vst.msk [vmem:[#allocation2 + $0x19] sm:$0xff] %vm39, %v37
  %43 = vst.msk [vmem:[#allocation2 + $0x21] sm:$0xff] %vm39, %v38
  %44 = vst [vmem:[#allocation3] sm:$0x1] 0.0
  %45 = vst [vmem:[#allocation3 + $0x18] sm:$0x1] 0.0
  %46 = vst [vmem:[#allocation3 + $0x11] sm:$0x1] 0.0
  %47 = vst [vmem:[#allocation3 + $0x29] sm:$0x1] 0.0
  %v48 = vld [vmem:[#allocation2] sm:$0xff]
  %v49 = vld [vmem:[#allocation2 + $0x8] sm:$0xff]
  %v50 = vld [vmem:[#allocation2 + $0x18] sm:$0xff]
  %v51 = vld [vmem:[#allocation2 + $0x20] sm:$0xff]
  %v52 = vld [vmem:[#allocation2 + $0x1] sm:$0xff]
  %v53 = vld [vmem:[#allocation2 + $0x9] sm:$0xff]
  %v54 = vld [vmem:[#allocation2 + $0x19] sm:$0xff]
  %v55 = vld [vmem:[#allocation2 + $0x21] sm:$0xff]
  %v56 = vld [vmem:[#allocation2 + $0x2] sm:$0xff]
  %v57 = vld [vmem:[#allocation2 + $0xa] sm:$0xff]
  %v58 = vld [vmem:[#allocation2 + $0x1a] sm:$0xff]
  %v59 = vld [vmem:[#allocation2 + $0x22] sm:$0xff]
  %64 = vrot.lane.b32.xlu0 %v52, 64
  %v65 = vpop.permute.xlu0 %64
  %66 = vrot.lane.b32.xlu0 %v53, 64
  %v67 = vpop.permute.xlu0 %66
  %68 = vrot.lane.b32.xlu0 %v54, 64
  %v69 = vpop.permute.xlu0 %68
  %70 = vrot.lane.b32.xlu0 %v55, 64
  %v71 = vpop.permute.xlu0 %70
  %v76 = vsel %vm39, %v48, %v65
  %v77 = vsel %vm39, %v49, %v67
  %v78 = vsel %vm39, %v50, %v69
  %v79 = vsel %vm39, %v51, %v71
  %v80 = vpack.c.bf16 %v77, %v76
  %v81 = vpack.c.bf16 %v57, %v56
  %v82 = vpack.c.bf16 %v79, %v78
  %v83 = vpack.c.bf16 %v59, %v58
  %v84 = vld [vmem:[%s1] sm:$0xf]
  %v85 = vld [vmem:[%s1 + $0x4] sm:$0xf]
  %v86 = vld [vmem:[%s1 + $0x8] sm:$0xf]
  %v87 = vld [vmem:[%s1 + $0xc] sm:$0xf]
  %v88 = vld [vmem:[%s1 + $0x10] sm:$0xf]
  %v89 = vld [vmem:[%s1 + $0x14] sm:$0xf]
  %v90 = vld [vmem:[%s1 + $0x18] sm:$0xf]
  %v91 = vld [vmem:[%s1 + $0x1c] sm:$0xf]
  %v92 = vld [vmem:[%s1 + $0x20] sm:$0xf]
  %v93 = vld [vmem:[%s1 + $0x24] sm:$0xf]
  %v94 = vld [vmem:[%s1 + $0x28] sm:$0xf]
  %v95 = vld [vmem:[%s1 + $0x2c] sm:$0xf]
  %v96 = vld [vmem:[%s1 + $0x30] sm:$0xf]
  %v97 = vld [vmem:[%s1 + $0x34] sm:$0xf]
  %v98 = vld [vmem:[%s1 + $0x38] sm:$0xf]
  %v99 = vld [vmem:[%s1 + $0x3c] sm:$0xf]
  %v100 = vld [vmem:[%s1 + $0x40] sm:$0xf]
  %v101 = vld [vmem:[%s1 + $0x44] sm:$0xf]
  %v102 = vld [vmem:[%s1 + $0x48] sm:$0xf]
  %v103 = vld [vmem:[%s1 + $0x4c] sm:$0xf]
  %v104 = vld [vmem:[%s1 + $0x50] sm:$0xf]
  %v105 = vld [vmem:[%s1 + $0x54] sm:$0xf]
  %v106 = vld [vmem:[%s1 + $0x58] sm:$0xf]
  %v107 = vld [vmem:[%s1 + $0x5c] sm:$0xf]
  %v132 = vunpack.c.l.b16 %v84
  %v133 = vunpack.c.l.b16 %v85
  %v134 = vunpack.c.l.b16 %v86
  %v135 = vunpack.c.l.b16 %v87
  %v136 = vunpack.c.l.b16 %v88
  %v137 = vunpack.c.l.b16 %v89
  %v138 = vunpack.c.l.b16 %v90
  %v139 = vunpack.c.l.b16 %v91
  %v140 = vunpack.c.l.b16 %v92
  %v141 = vunpack.c.l.b16 %v93
  %v142 = vunpack.c.l.b16 %v94
  %v143 = vunpack.c.l.b16 %v95
  %v144 = vunpack.c.l.b16 %v96
  %v145 = vunpack.c.l.b16 %v97
  %v146 = vunpack.c.l.b16 %v98
  %v147 = vunpack.c.l.b16 %v99
  %v148 = vunpack.c.l.b16 %v100
  %v149 = vunpack.c.l.b16 %v101
  %v150 = vunpack.c.l.b16 %v102
  %v151 = vunpack.c.l.b16 %v103
  %v152 = vunpack.c.l.b16 %v104
  %v153 = vunpack.c.l.b16 %v105
  %v154 = vunpack.c.l.b16 %v106
  %v155 = vunpack.c.l.b16 %v107
  %v156 = vpack.c.b16 %v133, %v132
  %v157 = vpack.c.b16 %v135, %v134
  %v158 = vpack.c.b16 %v137, %v136
  %v159 = vpack.c.b16 %v139, %v138
  %v160 = vpack.c.b16 %v141, %v140
  %v161 = vpack.c.b16 %v143, %v142
  %v162 = vpack.c.b16 %v145, %v144
  %v163 = vpack.c.b16 %v147, %v146
  %v164 = vpack.c.b16 %v149, %v148
  %v165 = vpack.c.b16 %v151, %v150
  %v166 = vpack.c.b16 %v153, %v152
  %v167 = vpack.c.b16 %v155, %v154
  %v181 = vsel %vm39, %v81, 0
  %v184 = vsel %vm39, %v83, 0
  %186 = vmatprep.subr.bf16.mxu0 0
  %187 = vmatpush1.bf16.msra.mxu0 %v156
  %188 = vmatprep.subr.bf16.mxu0 0
  %189 = vmatpush1.bf16.msra.mxu0 %v157
  %190 = vmatprep.subr.bf16.mxu0 0
  %191 = vmatpush1.bf16.msra.mxu0 %v158
  %192 = vmatprep.subr.bf16.mxu0 0
  %193 = vmatpush1.bf16.msra.mxu0 %v159
  %194 = vmatprep.subr.bf16.mxu0 0
  %195 = vmatpush1.bf16.msra.mxu0 %v160
  %196 = vmatprep.subr.bf16.mxu0 0
  %197 = vmatpush1.bf16.msra.mxu0 %v161
  %198 = vmatprep.subr.bf16.mxu0 0
  %199 = vmatpush1.bf16.msra.mxu0 %v162
  %200 = vmatprep.subr.bf16.mxu0 0
  %201 = vmatpush1.bf16.msra.mxu0 %v163
  %202 = vmatprep.subr.bf16.mxu0 0
  %203 = vmatpush1.bf16.msra.mxu0 %v164
  %204 = vmatprep.subr.bf16.mxu0 0
  %205 = vmatpush1.bf16.msra.mxu0 %v165
  %206 = vmatprep.subr.bf16.mxu0 0
  %207 = vmatpush1.bf16.msra.mxu0 %v166
  %208 = vmatprep.subr.bf16.mxu0 0
  %209 = vmatpush1.bf16.msra.mxu0 %v167
  %210 = vmatprep.subr.bf16.mxu0 0
  %211 = vmatpush1.bf16.msra.mxu0 0
  %212 = vmatprep.subr.bf16.mxu0 0
  %213 = vmatpush1.bf16.msra.mxu0 0
  %214 = vmatprep.subr.bf16.mxu0 0
  %215 = vmatpush1.bf16.msra.mxu0 0
  %216 = vmatprep.subr.bf16.mxu0 0
  %217 = vmatpush1.bf16.msra.mxu0 0
  %218 = vmatprep.mubr.bf16.mxu0 %v181
  %219 = vmatmul.mubr.bf16.gmra.mrb[0].mxu0 %v80
  %v220 = vpop.f32.mrb[0].mxu0
  %v221 = vadd.f32 0.0, %v220
  %v222 = vpop.f32.mrb[0].mxu0
  %v223 = vpop.f32.mrb[0].mxu0
  %v224 = vadd.f32 0.0, %v223
  %v225 = vpop.f32.mrb[0].mxu0
  %226 = vmatprep.mubr.bf16.mxu0 %v184
  %227 = vmatmul.mubr.bf16.gmra.mrb[0].mxu0 %v82
  %v228 = vpop.f32.mrb[0].mxu0
  %v229 = vadd.f32 0.0, %v228
  %v230 = vpop.f32.mrb[0].mxu0
  %v231 = vpop.f32.mrb[0].mxu0
  %v232 = vadd.f32 0.0, %v231
  %v233 = vpop.f32.mrb[0].mxu0
  %234 = vdwg.mxu0
  %v235 = vadd.f32 %v221, %v224
  %v236 = vadd.f32 %v235, %v229
  %v237 = vadd.f32 %v236, %v232
  %v238 = vrot.slane %v237, 4
  %v239 = vadd.f32 %v237, %v238
  %v240 = vrot.slane %v239, 2
  %v241 = vadd.f32 %v239, %v240
  %v242 = vrot.slane %v241, 1
  %v243 = vadd.f32 %v241, %v242
  %245 = vrot.lane.b32.xlu0 %v243, 64
  %v246 = vpop.permute.xlu0 %245
  %v248 = vadd.f32 %v243, %v246
  %250 = vrot.lane.b32.xlu0 %v248, 96
  %v251 = vpop.permute.xlu0 %250
  %v253 = vadd.f32 %v248, %v251
  %255 = vrot.lane.b32.xlu0 %v253, 112
  %v256 = vpop.permute.xlu0 %255
  %v258 = vadd.f32 %v253, %v256
  %260 = vrot.lane.b32.xlu0 %v258, 120
  %v261 = vpop.permute.xlu0 %260
  %v263 = vadd.f32 %v258, %v261
  %v264 = vmul.f32 %v263, 0.001953125
  %266 = vrot.lane.b32.xlu0 %v264, 8
  %v267 = vpop.permute.xlu0 %266
  %vm269 = vcmask 64512
  %v270 = vsel %vm269, %v264, %v267
  %272 = vrot.lane.b32.xlu0 %v270, 16
  %v273 = vpop.permute.xlu0 %272
  %vm275 = vcmask 130048
  %v276 = vsel %vm275, %v270, %v273
  %278 = vrot.lane.b32.xlu0 %v276, 32
  %v279 = vpop.permute.xlu0 %278
  %vm281 = vcmask 261120
  %v282 = vsel %vm281, %v276, %v279
  %284 = vrot.lane.b32.xlu0 %v282, 64
  %v285 = vpop.permute.xlu0 %284
  %v287 = vsel %vm39, %v282, %v285
  %v288 = vlaneseq
  %v289 = vshrl.u32 %v288, 7
  %v290 = vsub.s32 0, %v289
  %v291 = vrot.slane %v287, %v290
  %v292 = vsub.f32 %v221, %v291
  %v293 = vsub.f32 %v224, %v291
  %v294 = vsub.f32 %v229, %v291
  %v295 = vsub.f32 %v232, %v291
  %v296 = vmul.f32 %v292, %v292
  %v297 = vmul.f32 %v293, %v293
  %v298 = vmul.f32 %v294, %v294
  %v299 = vmul.f32 %v295, %v295
  %v300 = vadd.f32 %v296, %v297
  %v301 = vadd.f32 %v300, %v298
  %v302 = vadd.f32 %v301, %v299
  %v303 = vrot.slane %v302, 4
  %v304 = vadd.f32 %v302, %v303
  %v305 = vrot.slane %v304, 2
  %v306 = vadd.f32 %v304, %v305
  %v307 = vrot.slane %v306, 1
  %v308 = vadd.f32 %v306, %v307
  %310 = vrot.lane.b32.xlu0 %v308, 64
  %v311 = vpop.permute.xlu0 %310
  %v313 = vadd.f32 %v308, %v311
  %315 = vrot.lane.b32.xlu0 %v313, 96
  %v316 = vpop.permute.xlu0 %315
  %v318 = vadd.f32 %v313, %v316
  %320 = vrot.lane.b32.xlu0 %v318, 112
  %v321 = vpop.permute.xlu0 %320
  %v323 = vadd.f32 %v318, %v321
  %325 = vrot.lane.b32.xlu0 %v323, 120
  %v326 = vpop.permute.xlu0 %325
  %v328 = vadd.f32 %v323, %v326
  %v329 = vmul.f32 %v328, 0.001953125
  %v330 = vld [vmem:[%s3] sm:$0x1]
  %v331 = vadd.f32 %v329, 1e-05
  %v332 = vrsqrt.pop %v331
  %v333 = vmul.f32 %v330, %v332
  %v334 = vld [vmem:[%s4] sm:$0x1]
  %v335 = vmul.f32 %v264, %v333
  %v336 = vsub.f32 %v334, %v335
  %v338 = vlaneseq
  %v339 = vshrl.u32 %v338, 7
  %v340 = vsub.s32 0, %v339
  %v341 = vrot.slane %v336, %v340
  %vm343 = vcmask 1040384
  %v344 = vsel %vm343, %v333, %v341
  %346 = vrot.lane.b32.xlu0 %v344, 8
  %v347 = vpop.permute.xlu0 %346
  %v349 = vsel %vm269, %v344, %v347
  %351 = vrot.lane.b32.xlu0 %v349, 16
  %v352 = vpop.permute.xlu0 %351
  %v354 = vsel %vm275, %v349, %v352
  %356 = vrot.lane.b32.xlu0 %v354, 32
  %v357 = vpop.permute.xlu0 %356
  %v359 = vsel %vm281, %v354, %v357
  %361 = vrot.lane.b32.xlu0 %v359, 64
  %v362 = vpop.permute.xlu0 %361
  %v364 = vsel %vm39, %v359, %v362
  %v365 = vlaneseq
  %v366 = vshrl.u32 %v365, 7
  %v367 = vsub.s32 0, %v366
  %v368 = vrot.slane %v364, %v367
  %v369 = vmul.f32 %v221, %v368
  %v370 = vmul.f32 %v224, %v368
  %v371 = vmul.f32 %v229, %v368
  %v372 = vmul.f32 %v232, %v368
  %v373 = vlaneseq
  %v374 = vshrl.u32 %v373, 7
  %v375 = vsub.s32 1, %v374
  %v376 = vrot.slane %v364, %v375
  %v377 = vadd.f32 %v369, %v376
  %v378 = vadd.f32 %v370, %v376
  %v379 = vadd.f32 %v371, %v376
  %v380 = vadd.f32 %v372, %v376
  %v381 = vmul.f32 %v377, 0.5
  %v382 = vmul.f32 %v378, 0.5
  %v383 = vmul.f32 %v379, 0.5
  %v384 = vmul.f32 %v380, 0.5
  %v385 = vmul.f32 %v377, 0.70710677
  %v386 = vmul.f32 %v378, 0.70710677
  %v387 = vmul.f32 %v379, 0.70710677
  %v388 = vmul.f32 %v380, 0.70710677
  %vm389 = vcmp.lt.f32.partialorder %v385, 0.0
  %vm390 = vcmp.lt.f32.partialorder %v386, 0.0
  %vm391 = vcmp.lt.f32.partialorder %v387, 0.0
  %vm392 = vcmp.lt.f32.partialorder %v388, 0.0
  %v393 = vsel %vm389, -1.0, 1.0
  %v394 = vsel %vm390, -1.0, 1.0
  %v395 = vsel %vm391, -1.0, 1.0
  %v396 = vsel %vm392, -1.0, 1.0
  %v397 = vand.u32 2147483647, %v385
  %v398 = vand.u32 2147483647, %v386
  %v399 = vand.u32 2147483647, %v387
  %v400 = vand.u32 2147483647, %v388
  %v401 = vmul.f32 %v397, 0.3275911
  %v402 = vmul.f32 %v398, 0.3275911
  %v403 = vmul.f32 %v399, 0.3275911
  %v404 = vmul.f32 %v400, 0.3275911
  %v405 = vadd.f32 %v401, 1.0
  %v406 = vadd.f32 %v402, 1.0
  %v407 = vadd.f32 %v403, 1.0
  %v408 = vadd.f32 %v404, 1.0
  %v409 = vrcp.pop %v405
  %v410 = vrcp.pop %v406
  %v411 = vrcp.pop %v407
  %v412 = vrcp.pop %v408
  %v413 = vmul.f32 %v405, %v409
  %v414 = vmul.f32 %v406, %v410
  %v415 = vmul.f32 %v407, %v411
  %v416 = vmul.f32 %v408, %v412
  %v417 = vsub.f32 2.0, %v413
  %v418 = vsub.f32 2.0, %v414
  %v419 = vsub.f32 2.0, %v415
  %v420 = vsub.f32 2.0, %v416
  %v421 = vmul.f32 %v409, %v417
  %v422 = vmul.f32 %v410, %v418
  %v423 = vmul.f32 %v411, %v419
  %v424 = vmul.f32 %v412, %v420
  %v425 = vmul.f32 %v421, 1.0614054
  %v426 = vmul.f32 %v422, 1.0614054
  %v427 = vmul.f32 %v423, 1.0614054
  %v428 = vmul.f32 %v424, 1.0614054
  %v429 = vadd.f32 %v425, -1.4531521
  %v430 = vadd.f32 %v426, -1.4531521
  %v431 = vadd.f32 %v427, -1.4531521
  %v432 = vadd.f32 %v428, -1.4531521
  %v433 = vmul.f32 %v429, %v421
  %v434 = vmul.f32 %v430, %v422
  %v435 = vmul.f32 %v431, %v423
  %v436 = vmul.f32 %v432, %v424
  %v437 = vadd.f32 %v433, 1.4214138
  %v438 = vadd.f32 %v434, 1.4214138
  %v439 = vadd.f32 %v435, 1.4214138
  %v440 = vadd.f32 %v436, 1.4214138
  %v441 = vmul.f32 %v437, %v421
  %v442 = vmul.f32 %v438, %v422
  %v443 = vmul.f32 %v439, %v423
  %v444 = vmul.f32 %v440, %v424
  %v445 = vadd.f32 %v441, -0.28449672
  %v446 = vadd.f32 %v442, -0.28449672
  %v447 = vadd.f32 %v443, -0.28449672
  %v448 = vadd.f32 %v444, -0.28449672
  %v449 = vmul.f32 %v445, %v421
  %v450 = vmul.f32 %v446, %v422
  %v451 = vmul.f32 %v447, %v423
  %v452 = vmul.f32 %v448, %v424
  %v453 = vadd.f32 %v449, 0.2548296
  %v454 = vadd.f32 %v450, 0.2548296
  %v455 = vadd.f32 %v451, 0.2548296
  %v456 = vadd.f32 %v452, 0.2548296
  %v457 = vmul.f32 %v453, %v421
  %v458 = vmul.f32 %v454, %v422
  %v459 = vmul.f32 %v455, %v423
  %v460 = vmul.f32 %v456, %v424
  %v461 = vsub.f32 0.0, %v397
  %v462 = vsub.f32 0.0, %v398
  %v463 = vsub.f32 0.0, %v399
  %v464 = vsub.f32 0.0, %v400
  %v465 = vmul.f32 %v461, %v397
  %v466 = vmul.f32 %v462, %v398
  %v467 = vmul.f32 %v463, %v399
  %v468 = vmul.f32 %v464, %v400
  %v469 = vmul.f32 %v465, 1.442695
  %v470 = vpow.pop %v469
  %v471 = vmul.f32 %v466, 1.442695
  %v472 = vpow.pop %v471
  %v473 = vmul.f32 %v467, 1.442695
  %v474 = vpow.pop %v473
  %v475 = vmul.f32 %v468, 1.442695
  %v476 = vpow.pop %v475
  %v477 = vmul.f32 %v457, %v470
  %v478 = vmul.f32 %v458, %v472
  %v479 = vmul.f32 %v459, %v474
  %v480 = vmul.f32 %v460, %v476
  %v481 = vsub.f32 1.0, %v477
  %v482 = vsub.f32 1.0, %v478
  %v483 = vsub.f32 1.0, %v479
  %v484 = vsub.f32 1.0, %v480
  %v485 = vmul.f32 %v393, %v481
  %v486 = vmul.f32 %v394, %v482
  %v487 = vmul.f32 %v395, %v483
  %v488 = vmul.f32 %v396, %v484
  %v489 = vadd.f32 %v485, 1.0
  %v490 = vadd.f32 %v486, 1.0
  %v491 = vadd.f32 %v487, 1.0
  %v492 = vadd.f32 %v488, 1.0
  %v493 = vmul.f32 %v381, %v489
  %v494 = vmul.f32 %v382, %v490
  %v495 = vmul.f32 %v383, %v491
  %v496 = vmul.f32 %v384, %v492
  %497 = vst [vmem:[#allocation3 + $0x1] sm:$0xff] %v493
  %498 = vst [vmem:[#allocation3 + $0x9] sm:$0xff] %v494
  %499 = vst [vmem:[#allocation3 + $0x19] sm:$0xff] %v495
  %500 = vst [vmem:[#allocation3 + $0x21] sm:$0xff] %v496
  %v501 = vld [vmem:[#allocation3] sm:$0xff]
  %v502 = vld [vmem:[#allocation3 + $0x8] sm:$0xff]
  %v503 = vld [vmem:[#allocation3 + $0x18] sm:$0xff]
  %v504 = vld [vmem:[#allocation3 + $0x20] sm:$0xff]
  %v505 = vld [vmem:[#allocation3 + $0x1] sm:$0xff]
  %v506 = vld [vmem:[#allocation3 + $0x9] sm:$0xff]
  %v507 = vld [vmem:[#allocation3 + $0x19] sm:$0xff]
  %v508 = vld [vmem:[#allocation3 + $0x21] sm:$0xff]
  %v509 = vld [vmem:[#allocation3 + $0x2] sm:$0xff]
  %v510 = vld [vmem:[#allocation3 + $0xa] sm:$0xff]
  %v511 = vld [vmem:[#allocation3 + $0x1a] sm:$0xff]
  %v512 = vld [vmem:[#allocation3 + $0x22] sm:$0xff]
  %v513 = vpack.c.bf16 %v502, %v501
  %v514 = vpack.c.bf16 %v506, %v505
  %v515 = vpack.c.bf16 %v510, %v509
  %v516 = vpack.c.bf16 %v504, %v503
  %v517 = vpack.c.bf16 %v508, %v507
  %v518 = vpack.c.bf16 %v512, %v511
  %v519 = vld [vmem:[%s2] sm:$0xf]
  %v520 = vld [vmem:[%s2 + $0x4] sm:$0xf]
  %v521 = vld [vmem:[%s2 + $0x8] sm:$0xf]
  %v522 = vld [vmem:[%s2 + $0xc] sm:$0xf]
  %v523 = vld [vmem:[%s2 + $0x10] sm:$0xf]
  %v524 = vld [vmem:[%s2 + $0x14] sm:$0xf]
  %v525 = vld [vmem:[%s2 + $0x18] sm:$0xf]
  %v526 = vld [vmem:[%s2 + $0x1c] sm:$0xf]
  %v527 = vld [vmem:[%s2 + $0x20] sm:$0xf]
  %v528 = vld [vmem:[%s2 + $0x24] sm:$0xf]
  %v529 = vld [vmem:[%s2 + $0x28] sm:$0xf]
  %v530 = vld [vmem:[%s2 + $0x2c] sm:$0xf]
  %v531 = vld [vmem:[%s2 + $0x30] sm:$0xf]
  %v532 = vld [vmem:[%s2 + $0x34] sm:$0xf]
  %v533 = vld [vmem:[%s2 + $0x38] sm:$0xf]
  %v534 = vld [vmem:[%s2 + $0x3c] sm:$0xf]
  %v535 = vld [vmem:[%s2 + $0x40] sm:$0xf]
  %v536 = vld [vmem:[%s2 + $0x44] sm:$0xf]
  %v537 = vld [vmem:[%s2 + $0x48] sm:$0xf]
  %v538 = vld [vmem:[%s2 + $0x4c] sm:$0xf]
  %v539 = vld [vmem:[%s2 + $0x50] sm:$0xf]
  %v540 = vld [vmem:[%s2 + $0x54] sm:$0xf]
  %v541 = vld [vmem:[%s2 + $0x58] sm:$0xf]
  %v542 = vld [vmem:[%s2 + $0x5c] sm:$0xf]
  %v543 = vld [vmem:[%s2 + $0x60] sm:$0xf]
  %v544 = vld [vmem:[%s2 + $0x64] sm:$0xf]
  %v545 = vld [vmem:[%s2 + $0x68] sm:$0xf]
  %v546 = vld [vmem:[%s2 + $0x6c] sm:$0xf]
  %v547 = vld [vmem:[%s2 + $0x70] sm:$0xf]
  %v548 = vld [vmem:[%s2 + $0x74] sm:$0xf]
  %v549 = vld [vmem:[%s2 + $0x78] sm:$0xf]
  %v550 = vld [vmem:[%s2 + $0x7c] sm:$0xf]
  %v551 = vld [vmem:[%s2 + $0x80] sm:$0xf]
  %v552 = vld [vmem:[%s2 + $0x84] sm:$0xf]
  %v553 = vld [vmem:[%s2 + $0x88] sm:$0xf]
  %v554 = vld [vmem:[%s2 + $0x8c] sm:$0xf]
  %v555 = vld [vmem:[%s2 + $0x90] sm:$0xf]
  %v556 = vld [vmem:[%s2 + $0x94] sm:$0xf]
  %v557 = vld [vmem:[%s2 + $0x98] sm:$0xf]
  %v558 = vld [vmem:[%s2 + $0x9c] sm:$0xf]
  %v559 = vld [vmem:[%s2 + $0xa0] sm:$0xf]
  %v560 = vld [vmem:[%s2 + $0xa4] sm:$0xf]
  %v561 = vld [vmem:[%s2 + $0xa8] sm:$0xf]
  %v562 = vld [vmem:[%s2 + $0xac] sm:$0xf]
  %v563 = vld [vmem:[%s2 + $0xb0] sm:$0xf]
  %v564 = vld [vmem:[%s2 + $0xb4] sm:$0xf]
  %v565 = vld [vmem:[%s2 + $0xb8] sm:$0xf]
  %v566 = vld [vmem:[%s2 + $0xbc] sm:$0xf]
  %v615 = vunpack.c.l.b16 %v519
  %v616 = vunpack.c.l.b16 %v520
  %v617 = vunpack.c.l.b16 %v521
  %v618 = vunpack.c.l.b16 %v522
  %v619 = vunpack.c.l.b16 %v523
  %v620 = vunpack.c.l.b16 %v524
  %v621 = vunpack.c.l.b16 %v525
  %v622 = vunpack.c.l.b16 %v526
  %v623 = vunpack.c.l.b16 %v527
  %v624 = vunpack.c.l.b16 %v528
  %v625 = vunpack.c.l.b16 %v529
  %v626 = vunpack.c.l.b16 %v530
  %v627 = vunpack.c.l.b16 %v531
  %v628 = vunpack.c.l.b16 %v532
  %v629 = vunpack.c.l.b16 %v533
  %v630 = vunpack.c.l.b16 %v534
  %v631 = vunpack.c.l.b16 %v535
  %v632 = vunpack.c.l.b16 %v536
  %v633 = vunpack.c.l.b16 %v537
  %v634 = vunpack.c.l.b16 %v538
  %v635 = vunpack.c.l.b16 %v539
  %v636 = vunpack.c.l.b16 %v540
  %v637 = vunpack.c.l.b16 %v541
  %v638 = vunpack.c.l.b16 %v542
  %v639 = vunpack.c.l.b16 %v543
  %v640 = vunpack.c.l.b16 %v544
  %v641 = vunpack.c.l.b16 %v545
  %v642 = vunpack.c.l.b16 %v546
  %v643 = vunpack.c.l.b16 %v547
  %v644 = vunpack.c.l.b16 %v548
  %v645 = vunpack.c.l.b16 %v549
  %v646 = vunpack.c.l.b16 %v550
  %v647 = vunpack.c.l.b16 %v551
  %v648 = vunpack.c.l.b16 %v552
  %v649 = vunpack.c.l.b16 %v553
  %v650 = vunpack.c.l.b16 %v554
  %v651 = vunpack.c.l.b16 %v555
  %v652 = vunpack.c.l.b16 %v556
  %v653 = vunpack.c.l.b16 %v557
  %v654 = vunpack.c.l.b16 %v558
  %v655 = vunpack.c.l.b16 %v559
  %v656 = vunpack.c.l.b16 %v560
  %v657 = vunpack.c.l.b16 %v561
  %v658 = vunpack.c.l.b16 %v562
  %v659 = vunpack.c.l.b16 %v563
  %v660 = vunpack.c.l.b16 %v564
  %v661 = vunpack.c.l.b16 %v565
  %v662 = vunpack.c.l.b16 %v566
  %v663 = vpack.c.b16 %v616, %v615
  %v664 = vpack.c.b16 %v618, %v617
  %v665 = vpack.c.b16 %v620, %v619
  %v666 = vpack.c.b16 %v622, %v621
  %v667 = vpack.c.b16 %v624, %v623
  %v668 = vpack.c.b16 %v626, %v625
  %v669 = vpack.c.b16 %v628, %v627
  %v670 = vpack.c.b16 %v630, %v629
  %v671 = vpack.c.b16 %v632, %v631
  %v672 = vpack.c.b16 %v634, %v633
  %v673 = vpack.c.b16 %v636, %v635
  %v674 = vpack.c.b16 %v638, %v637
  %v675 = vpack.c.b16 %v640, %v639
  %v676 = vpack.c.b16 %v642, %v641
  %v677 = vpack.c.b16 %v644, %v643
  %v678 = vpack.c.b16 %v646, %v645
  %v679 = vpack.c.b16 %v648, %v647
  %v680 = vpack.c.b16 %v650, %v649
  %v681 = vpack.c.b16 %v652, %v651
  %v682 = vpack.c.b16 %v654, %v653
  %v683 = vpack.c.b16 %v656, %v655
  %v684 = vpack.c.b16 %v658, %v657
  %v685 = vpack.c.b16 %v660, %v659
  %v686 = vpack.c.b16 %v662, %v661
  %711 = vmatprep.subr.bf16.mxu0 0
  %712 = vmatpush1.bf16.msra.mxu0 %v663
  %713 = vmatprep.subr.bf16.mxu0 0
  %714 = vmatpush1.bf16.msra.mxu0 %v664
  %715 = vmatprep.subr.bf16.mxu0 0
  %716 = vmatpush1.bf16.msra.mxu0 %v665
  %717 = vmatprep.subr.bf16.mxu0 0
  %718 = vmatpush1.bf16.msra.mxu0 %v666
  %719 = vmatprep.subr.bf16.mxu0 0
  %720 = vmatpush1.bf16.msra.mxu0 %v667
  %721 = vmatprep.subr.bf16.mxu0 0
  %722 = vmatpush1.bf16.msra.mxu0 %v668
  %723 = vmatprep.subr.bf16.mxu0 0
  %724 = vmatpush1.bf16.msra.mxu0 %v669
  %725 = vmatprep.subr.bf16.mxu0 0
  %726 = vmatpush1.bf16.msra.mxu0 %v670
  %727 = vmatprep.subr.bf16.mxu0 0
  %728 = vmatpush1.bf16.msra.mxu0 %v671
  %729 = vmatprep.subr.bf16.mxu0 0
  %730 = vmatpush1.bf16.msra.mxu0 %v672
  %731 = vmatprep.subr.bf16.mxu0 0
  %732 = vmatpush1.bf16.msra.mxu0 %v673
  %733 = vmatprep.subr.bf16.mxu0 0
  %734 = vmatpush1.bf16.msra.mxu0 %v674
  %735 = vmatprep.subr.bf16.mxu0 0
  %736 = vmatpush1.bf16.msra.mxu0 %v675
  %737 = vmatprep.subr.bf16.mxu0 0
  %738 = vmatpush1.bf16.msra.mxu0 %v676
  %739 = vmatprep.subr.bf16.mxu0 0
  %740 = vmatpush1.bf16.msra.mxu0 %v677
  %741 = vmatprep.subr.bf16.mxu0 0
  %742 = vmatpush1.bf16.msra.mxu0 %v678
  %743 = vmatprep.mubr.bf16.mxu0 %v514
  %744 = vmatmul.mubr.bf16.gmra.mrb[0].mxu0 %v513
  %v745 = vpop.f32.mrb[0].mxu0
  %v746 = vadd.f32 0.0, %v745
  %v747 = vpop.f32.mrb[0].mxu0
  %v748 = vpop.f32.mrb[0].mxu0
  %v749 = vadd.f32 0.0, %v748
  %v750 = vpop.f32.mrb[0].mxu0
  %751 = vmatprep.mubr.bf16.mxu0 %v517
  %752 = vmatmul.mubr.bf16.gmra.mrb[0].mxu0 %v516
  %v753 = vpop.f32.mrb[0].mxu0
  %v754 = vadd.f32 0.0, %v753
  %v755 = vpop.f32.mrb[0].mxu0
  %v756 = vpop.f32.mrb[0].mxu0
  %v757 = vadd.f32 0.0, %v756
  %v758 = vpop.f32.mrb[0].mxu0
  %759 = vdwg.mxu0
  %760 = vmatprep.subr.bf16.mxu0 0
  %761 = vmatpush1.bf16.msra.mxu0 %v679
  %762 = vmatprep.subr.bf16.mxu0 0
  %763 = vmatpush1.bf16.msra.mxu0 %v680
  %764 = vmatprep.subr.bf16.mxu0 0
  %765 = vmatpush1.bf16.msra.mxu0 %v681
  %766 = vmatprep.subr.bf16.mxu0 0
  %767 = vmatpush1.bf16.msra.mxu0 %v682
  %768 = vmatprep.subr.bf16.mxu0 0
  %769 = vmatpush1.bf16.msra.mxu0 %v683
  %770 = vmatprep.subr.bf16.mxu0 0
  %771 = vmatpush1.bf16.msra.mxu0 %v684
  %772 = vmatprep.subr.bf16.mxu0 0
  %773 = vmatpush1.bf16.msra.mxu0 %v685
  %774 = vmatprep.subr.bf16.mxu0 0
  %775 = vmatpush1.bf16.msra.mxu0 %v686
  %776 = vmatprep.subr.bf16.mxu0 0
  %777 = vmatpush1.bf16.msra.mxu0 0
  %778 = vmatprep.subr.bf16.mxu0 0
  %779 = vmatpush1.bf16.msra.mxu0 0
  %780 = vmatprep.subr.bf16.mxu0 0
  %781 = vmatpush1.bf16.msra.mxu0 0
  %782 = vmatprep.subr.bf16.mxu0 0
  %783 = vmatpush1.bf16.msra.mxu0 0
  %784 = vmatprep.subr.bf16.mxu0 0
  %785 = vmatpush1.bf16.msra.mxu0 0
  %786 = vmatprep.subr.bf16.mxu0 0
  %787 = vmatpush1.bf16.msra.mxu0 0
  %788 = vmatprep.subr.bf16.mxu0 0
  %789 = vmatpush1.bf16.msra.mxu0 0
  %790 = vmatprep.subr.bf16.mxu0 0
  %791 = vmatpush1.bf16.msra.mxu0 0
  %792 = vmatprep.mubr.bf16.mxu0 0
  %793 = vmatmul.mubr.bf16.gmra.mrb[0].mxu0 %v515
  %v794 = vpop.f32.mrb[0].mxu0
  %v795 = vadd.f32 %v746, %v794
  %v796 = vpop.f32.mrb[0].mxu0
  %v797 = vpop.f32.mrb[0].mxu0
  %v798 = vadd.f32 %v749, %v797
  %v799 = vpop.f32.mrb[0].mxu0
  %800 = vmatprep.mubr.bf16.mxu0 0
  %801 = vmatmul.mubr.bf16.gmra.mrb[0].mxu0 %v518
  %v802 = vpop.f32.mrb[0].mxu0
  %v803 = vadd.f32 %v754, %v802
  %v804 = vpop.f32.mrb[0].mxu0
  %v805 = vpop.f32.mrb[0].mxu0
  %v806 = vadd.f32 %v757, %v805
  %v807 = vpop.f32.mrb[0].mxu0
  %808 = vdwg.mxu0
  %v809 = vsel %vm39, %v795, 0.0
  %v810 = vsel %vm39, %v798, 0.0
  %v811 = vadd.f32 %v809, %v810
  %v812 = vsel %vm39, %v803, 0.0
  %v813 = vadd.f32 %v811, %v812
  %v814 = vsel %vm39, %v806, 0.0
  %v815 = vadd.f32 %v813, %v814
  %v816 = vrot.slane %v815, 4
  %v817 = vadd.f32 %v815, %v816
  %v818 = vrot.slane %v817, 2
  %v819 = vadd.f32 %v817, %v818
  %v820 = vrot.slane %v819, 1
  %v821 = vadd.f32 %v819, %v820
  %823 = vrot.lane.b32.xlu0 %v821, 96
  %v824 = vpop.permute.xlu0 %823
  %v826 = vadd.f32 %v821, %v824
  %828 = vrot.lane.b32.xlu0 %v826, 112
  %v829 = vpop.permute.xlu0 %828
  %v831 = vadd.f32 %v826, %v829
  %833 = vrot.lane.b32.xlu0 %v831, 120
  %v834 = vpop.permute.xlu0 %833
  %v836 = vadd.f32 %v831, %v834
  %838 = vrot.lane.b32.xlu0 %v836, 124
  %v839 = vpop.permute.xlu0 %838
  %v841 = vadd.f32 %v836, %v839
  %v842 = vmul.f32 %v841, 0.001953125
  %844 = vrot.lane.b32.xlu0 %v842, 4
  %v845 = vpop.permute.xlu0 %844
  %vm847 = vcmask 31744
  %v848 = vsel %vm847, %v842, %v845
  %850 = vrot.lane.b32.xlu0 %v848, 8
  %v851 = vpop.permute.xlu0 %850
  %v853 = vsel %vm269, %v848, %v851
  %855 = vrot.lane.b32.xlu0 %v853, 16
  %v856 = vpop.permute.xlu0 %855
  %v858 = vsel %vm275, %v853, %v856
  %860 = vrot.lane.b32.xlu0 %v858, 32
  %v861 = vpop.permute.xlu0 %860
  %v863 = vsel %vm281, %v858, %v861
  %v864 = vlaneseq
  %v865 = vshrl.u32 %v864, 7
  %v866 = vsub.s32 0, %v865
  %v867 = vrot.slane %v863, %v866
  %v868 = vsub.f32 %v795, %v867
  %v869 = vsub.f32 %v798, %v867
  %v870 = vsub.f32 %v803, %v867
  %v871 = vsub.f32 %v806, %v867
  %v872 = vmul.f32 %v868, %v868
  %v873 = vmul.f32 %v869, %v869
  %v874 = vmul.f32 %v870, %v870
  %v875 = vmul.f32 %v871, %v871
  %v876 = vsel %vm39, %v872, 0.0
  %v877 = vsel %vm39, %v873, 0.0
  %v878 = vadd.f32 %v876, %v877
  %v879 = vsel %vm39, %v874, 0.0
  %v880 = vadd.f32 %v878, %v879
  %v881 = vsel %vm39, %v875, 0.0
  %v882 = vadd.f32 %v880, %v881
  %v883 = vrot.slane %v882, 4
  %v884 = vadd.f32 %v882, %v883
  %v885 = vrot.slane %v884, 2
  %v886 = vadd.f32 %v884, %v885
  %v887 = vrot.slane %v886, 1
  %v888 = vadd.f32 %v886, %v887
  %890 = vrot.lane.b32.xlu0 %v888, 96
  %v891 = vpop.permute.xlu0 %890
  %v893 = vadd.f32 %v888, %v891
  %895 = vrot.lane.b32.xlu0 %v893, 112
  %v896 = vpop.permute.xlu0 %895
  %v898 = vadd.f32 %v893, %v896
  %900 = vrot.lane.b32.xlu0 %v898, 120
  %v901 = vpop.permute.xlu0 %900
  %v903 = vadd.f32 %v898, %v901
  %905 = vrot.lane.b32.xlu0 %v903, 124
  %v906 = vpop.permute.xlu0 %905
  %v908 = vadd.f32 %v903, %v906
  %v909 = vmul.f32 %v908, 0.001953125
  %v910 = vld [vmem:[%s5] sm:$0x1]
  %v911 = vadd.f32 %v909, 1e-05
  %v912 = vrsqrt.pop %v911
  %v913 = vmul.f32 %v910, %v912
  %v914 = vld [vmem:[%s6] sm:$0x1]
  %v915 = vmul.f32 %v842, %v913
  %v916 = vsub.f32 %v914, %v915
  %v918 = vlaneseq
  %v919 = vshrl.u32 %v918, 7
  %v920 = vsub.s32 0, %v919
  %v921 = vrot.slane %v916, %v920
  %v923 = vsel %vm343, %v913, %v921
  %925 = vrot.lane.b32.xlu0 %v923, 4
  %v926 = vpop.permute.xlu0 %925
  %v928 = vsel %vm847, %v923, %v926
  %930 = vrot.lane.b32.xlu0 %v928, 8
  %v931 = vpop.permute.xlu0 %930
  %v933 = vsel %vm269, %v928, %v931
  %935 = vrot.lane.b32.xlu0 %v933, 16
  %v936 = vpop.permute.xlu0 %935
  %v938 = vsel %vm275, %v933, %v936
  %940 = vrot.lane.b32.xlu0 %v938, 32
  %v941 = vpop.permute.xlu0 %940
  %v943 = vsel %vm281, %v938, %v941
  %v944 = vlaneseq
  %v945 = vshrl.u32 %v944, 7
  %v946 = vsub.s32 0, %v945
  %v947 = vrot.slane %v943, %v946
  %v948 = vmul.f32 %v795, %v947
  %v949 = vmul.f32 %v798, %v947
  %v950 = vmul.f32 %v803, %v947
  %v951 = vmul.f32 %v806, %v947
  %v952 = vlaneseq
  %v953 = vshrl.u32 %v952, 7
  %v954 = vsub.s32 1, %v953
  %v955 = vrot.slane %v943, %v954
  %v956 = vadd.f32 %v948, %v955
  %v957 = vadd.f32 %v949, %v955
  %v958 = vadd.f32 %v950, %v955
  %v959 = vadd.f32 %v951, %v955
  %v960 = vld [vmem:[%s0] sm:$0xff]
  %v961 = vld [vmem:[%s0 + $0x8] sm:$0xff]
  %v962 = vld [vmem:[%s0 + $0x10] sm:$0xff]
  %v963 = vld [vmem:[%s0 + $0x18] sm:$0xff]
  %v964 = vadd.f32 %v956, %v960
  %v965 = vadd.f32 %v957, %v961
  %v966 = vadd.f32 %v958, %v962
  %v967 = vadd.f32 %v959, %v963
  %v968 = vmul.f32 %v964, 0.5
  %v969 = vmul.f32 %v965, 0.5
  %v970 = vmul.f32 %v966, 0.5
  %v971 = vmul.f32 %v967, 0.5
  %v972 = vmul.f32 %v964, 0.70710677
  %v973 = vmul.f32 %v965, 0.70710677
  %v974 = vmul.f32 %v966, 0.70710677
  %v975 = vmul.f32 %v967, 0.70710677
  %vm976 = vcmp.lt.f32.partialorder %v972, 0.0
  %vm977 = vcmp.lt.f32.partialorder %v973, 0.0
  %vm978 = vcmp.lt.f32.partialorder %v974, 0.0
  %vm979 = vcmp.lt.f32.partialorder %v975, 0.0
  %v980 = vsel %vm976, -1.0, 1.0
  %v981 = vsel %vm977, -1.0, 1.0
  %v982 = vsel %vm978, -1.0, 1.0
  %v983 = vsel %vm979, -1.0, 1.0
  %v984 = vand.u32 2147483647, %v972
  %v985 = vand.u32 2147483647, %v973
  %v986 = vand.u32 2147483647, %v974
  %v987 = vand.u32 2147483647, %v975
  %v988 = vmul.f32 %v984, 0.3275911
  %v989 = vmul.f32 %v985, 0.3275911
  %v990 = vmul.f32 %v986, 0.3275911
  %v991 = vmul.f32 %v987, 0.3275911
  %v992 = vadd.f32 %v988, 1.0
  %v993 = vadd.f32 %v989, 1.0
  %v994 = vadd.f32 %v990, 1.0
  %v995 = vadd.f32 %v991, 1.0
  %v996 = vrcp.pop %v992
  %v997 = vrcp.pop %v993
  %v998 = vrcp.pop %v994
  %v999 = vrcp.pop %v995
  %v1000 = vmul.f32 %v992, %v996
  %v1001 = vmul.f32 %v993, %v997
  %v1002 = vmul.f32 %v994, %v998
  %v1003 = vmul.f32 %v995, %v999
  %v1004 = vsub.f32 2.0, %v1000
  %v1005 = vsub.f32 2.0, %v1001
  %v1006 = vsub.f32 2.0, %v1002
  %v1007 = vsub.f32 2.0, %v1003
  %v1008 = vmul.f32 %v996, %v1004
  %v1009 = vmul.f32 %v997, %v1005
  %v1010 = vmul.f32 %v998, %v1006
  %v1011 = vmul.f32 %v999, %v1007
  %v1012 = vmul.f32 %v1008, 1.0614054
  %v1013 = vmul.f32 %v1009, 1.0614054
  %v1014 = vmul.f32 %v1010, 1.0614054
  %v1015 = vmul.f32 %v1011, 1.0614054
  %v1016 = vadd.f32 %v1012, -1.4531521
  %v1017 = vadd.f32 %v1013, -1.4531521
  %v1018 = vadd.f32 %v1014, -1.4531521
  %v1019 = vadd.f32 %v1015, -1.4531521
  %v1020 = vmul.f32 %v1016, %v1008
  %v1021 = vmul.f32 %v1017, %v1009
  %v1022 = vmul.f32 %v1018, %v1010
  %v1023 = vmul.f32 %v1019, %v1011
  %v1024 = vadd.f32 %v1020, 1.4214138
  %v1025 = vadd.f32 %v1021, 1.4214138
  %v1026 = vadd.f32 %v1022, 1.4214138
  %v1027 = vadd.f32 %v1023, 1.4214138
  %v1028 = vmul.f32 %v1024, %v1008
  %v1029 = vmul.f32 %v1025, %v1009
  %v1030 = vmul.f32 %v1026, %v1010
  %v1031 = vmul.f32 %v1027, %v1011
  %v1032 = vadd.f32 %v1028, -0.28449672
  %v1033 = vadd.f32 %v1029, -0.28449672
  %v1034 = vadd.f32 %v1030, -0.28449672
  %v1035 = vadd.f32 %v1031, -0.28449672
  %v1036 = vmul.f32 %v1032, %v1008
  %v1037 = vmul.f32 %v1033, %v1009
  %v1038 = vmul.f32 %v1034, %v1010
  %v1039 = vmul.f32 %v1035, %v1011
  %v1040 = vadd.f32 %v1036, 0.2548296
  %v1041 = vadd.f32 %v1037, 0.2548296
  %v1042 = vadd.f32 %v1038, 0.2548296
  %v1043 = vadd.f32 %v1039, 0.2548296
  %v1044 = vmul.f32 %v1040, %v1008
  %v1045 = vmul.f32 %v1041, %v1009
  %v1046 = vmul.f32 %v1042, %v1010
  %v1047 = vmul.f32 %v1043, %v1011
  %v1048 = vsub.f32 0.0, %v984
  %v1049 = vsub.f32 0.0, %v985
  %v1050 = vsub.f32 0.0, %v986
  %v1051 = vsub.f32 0.0, %v987
  %v1052 = vmul.f32 %v1048, %v984
  %v1053 = vmul.f32 %v1049, %v985
  %v1054 = vmul.f32 %v1050, %v986
  %v1055 = vmul.f32 %v1051, %v987
  %v1056 = vmul.f32 %v1052, 1.442695
  %v1057 = vpow.pop %v1056
  %v1058 = vmul.f32 %v1053, 1.442695
  %v1059 = vpow.pop %v1058
  %v1060 = vmul.f32 %v1054, 1.442695
  %v1061 = vpow.pop %v1060
  %v1062 = vmul.f32 %v1055, 1.442695
  %v1063 = vpow.pop %v1062
  %v1064 = vmul.f32 %v1044, %v1057
  %v1065 = vmul.f32 %v1045, %v1059
  %v1066 = vmul.f32 %v1046, %v1061
  %v1067 = vmul.f32 %v1047, %v1063
  %v1068 = vsub.f32 1.0, %v1064
  %v1069 = vsub.f32 1.0, %v1065
  %v1070 = vsub.f32 1.0, %v1066
  %v1071 = vsub.f32 1.0, %v1067
  %v1072 = vmul.f32 %v980, %v1068
  %v1073 = vmul.f32 %v981, %v1069
  %v1074 = vmul.f32 %v982, %v1070
  %v1075 = vmul.f32 %v983, %v1071
  %v1076 = vadd.f32 %v1072, 1.0
  %v1077 = vadd.f32 %v1073, 1.0
  %v1078 = vadd.f32 %v1074, 1.0
  %v1079 = vadd.f32 %v1075, 1.0
  %v1080 = vmul.f32 %v968, %v1076
  %v1081 = vmul.f32 %v969, %v1077
  %v1082 = vmul.f32 %v970, %v1078
  %v1083 = vmul.f32 %v971, %v1079
  %v1084 = vld [vmem:[%s7] sm:$0xff]
  %v1085 = vld [vmem:[%s7 + $0x8] sm:$0xff]
  %v1086 = vld [vmem:[%s7 + $0x10] sm:$0xff]
  %v1087 = vld [vmem:[%s7 + $0x18] sm:$0xff]
  %v1088 = vld [vmem:[%s7 + $0x20] sm:$0xff]
  %v1089 = vld [vmem:[%s7 + $0x28] sm:$0xff]
  %v1090 = vld [vmem:[%s7 + $0x30] sm:$0xff]
  %v1091 = vld [vmem:[%s7 + $0x38] sm:$0xff]
  %v1093 = vsel %vm39, %v1080, 0
  %v1096 = vsel %vm39, %v1081, 0
  %v1099 = vsel %vm39, %v1082, 0
  %v1102 = vsel %vm39, %v1083, 0
  %1104 = vmatprep.subr.mxu0 0.0
  %1105 = vmatpush1.msra.mxu0 %v1084
  %1106 = vmatprep.subr.mxu0 0.0
  %1107 = vmatpush1.msra.mxu0 %v1085
  %1108 = vmatprep.subr.mxu0 0.0
  %1109 = vmatpush1.msra.mxu0 %v1086
  %1110 = vmatprep.subr.mxu0 0.0
  %1111 = vmatpush1.msra.mxu0 %v1087
  %1112 = vmatprep.subr.mxu0 0.0
  %1113 = vmatpush1.msra.mxu0 %v1088
  %1114 = vmatprep.subr.mxu0 0.0
  %1115 = vmatpush1.msra.mxu0 %v1089
  %1116 = vmatprep.subr.mxu0 0.0
  %1117 = vmatpush1.msra.mxu0 %v1090
  %1118 = vmatprep.subr.mxu0 0.0
  %1119 = vmatpush1.msra.mxu0 %v1091
  %1120 = vmatprep.subr.mxu0 0.0
  %1121 = vmatpush1.msra.mxu0 0.0
  %1122 = vmatprep.subr.mxu0 0.0
  %1123 = vmatpush1.msra.mxu0 0.0
  %1124 = vmatprep.subr.mxu0 0.0
  %1125 = vmatpush1.msra.mxu0 0.0
  %1126 = vmatprep.subr.mxu0 0.0
  %1127 = vmatpush1.msra.mxu0 0.0
  %1128 = vmatprep.subr.mxu0 0.0
  %1129 = vmatpush1.msra.mxu0 0.0
  %1130 = vmatprep.subr.mxu0 0.0
  %1131 = vmatpush1.msra.mxu0 0.0
  %1132 = vmatprep.subr.mxu0 0.0
  %1133 = vmatpush1.msra.mxu0 0.0
  %1134 = vmatprep.subr.mxu0 0.0
  %1135 = vmatpush1.msra.mxu0 0.0
  %1136 = vmatprep.subr.mxu0 0.0
  %1137 = vmatpush1.msra.mxu0 0.0
  %1138 = vmatprep.subr.mxu0 0.0
  %1139 = vmatpush1.msra.mxu0 0.0
  %1140 = vmatprep.subr.mxu0 0.0
  %1141 = vmatpush1.msra.mxu0 0.0
  %1142 = vmatprep.subr.mxu0 0.0
  %1143 = vmatpush1.msra.mxu0 0.0
  %1144 = vmatprep.subr.mxu0 0.0
  %1145 = vmatpush1.msra.mxu0 0.0
  %1146 = vmatprep.subr.mxu0 0.0
  %1147 = vmatpush1.msra.mxu0 0.0
  %1148 = vmatprep.subr.mxu0 0.0
  %1149 = vmatpush1.msra.mxu0 0.0
  %1150 = vmatprep.subr.mxu0 0.0
  %1151 = vmatpush1.msra.mxu0 0.0
  %1152 = vmatprep.subr.mxu0 0.0
  %1153 = vmatpush1.msra.mxu0 0.0
  %1154 = vmatprep.subr.mxu0 0.0
  %1155 = vmatpush1.msra.mxu0 0.0
  %1156 = vmatprep.subr.mxu0 0.0
  %1157 = vmatpush1.msra.mxu0 0.0
  %1158 = vmatprep.subr.mxu0 0.0
  %1159 = vmatpush1.msra.mxu0 0.0
  %1160 = vmatprep.subr.mxu0 0.0
  %1161 = vmatpush1.msra.mxu0 0.0
  %1162 = vmatprep.subr.mxu0 0.0
  %1163 = vmatpush1.msra.mxu0 0.0
  %1164 = vmatprep.subr.mxu0 0.0
  %1165 = vmatpush1.msra.mxu0 0.0
  %1166 = vmatprep.subr.mxu0 0.0
  %1167 = vmatpush1.msra.mxu0 0.0
  %1168 = vmatprep.mubr.f32.mxu0 0.0
  %1169 = vmatmul.mubr.f32.gmra.mrb[0].mxu0 %v1093
  %v1170 = vpop.f32.mrb[0].mxu0
  %v1171 = vadd.f32 0.0, %v1170
  %v1172 = vpop.f32.mrb[0].mxu0
  %1173 = vmatprep.mubr.f32.mxu0 0.0
  %1174 = vmatmul.mubr.f32.gmra.mrb[0].mxu0 %v1096
  %v1175 = vpop.f32.mrb[0].mxu0
  %v1176 = vadd.f32 0.0, %v1175
  %v1177 = vpop.f32.mrb[0].mxu0
  %1178 = vmatprep.mubr.f32.mxu0 0.0
  %1179 = vmatmul.mubr.f32.gmra.mrb[0].mxu0 %v1099
  %v1180 = vpop.f32.mrb[0].mxu0
  %v1181 = vadd.f32 0.0, %v1180
  %v1182 = vpop.f32.mrb[0].mxu0
  %1183 = vmatprep.mubr.f32.mxu0 0.0
  %1184 = vmatmul.mubr.f32.gmra.mrb[0].mxu0 %v1102
  %v1185 = vpop.f32.mrb[0].mxu0
  %v1186 = vadd.f32 0.0, %v1185
  %v1187 = vpop.f32.mrb[0].mxu0
  %1188 = vdwg.mxu0
  %1189 = vst.msk [vmem:[%s8] sm:$0xff] %vm281, %v1171
  %1190 = vst.msk [vmem:[%s8 + $0x8] sm:$0xff] %vm281, %v1176
  %1191 = vst.msk [vmem:[%s8 + $0x10] sm:$0xff] %vm281, %v1181
  %1192 = vst.msk [vmem:[%s8 + $0x18] sm:$0xff] %vm281, %v1186
  // Predicated region
  $region34: #{resnet_forward.1} parent=0 // pred_check
    _
  $region35: #{resnet_forward.1} parent=0 // pred_check_branch
    %1194 = sbr.rel (0) target = $region37
  $region36: #{resnet_forward.1} parent=0 // pred_region
    _
  $region37: #{resnet_forward.1} parent=0 // pred_fallthru
    _
  // Predicated region
  $region38: #{resnet_forward.1} parent=0 // pred_check
    _
  $region39: #{resnet_forward.1} parent=0 // pred_check_branch
    %1196 = sbr.rel (0) target = $region41
  $region40: #{resnet_forward.1} parent=0 // pred_region
    _
  $region41: #{resnet_forward.1} parent=0 // pred_fallthru
    _

</llo_original>
